<compile_context>
chip_gen: v5e
topology: v5e:2x2
jax: 0.10.0
libtpu: 0.0.40
codegen_flags: <defaults>
</compile_context>

<pallas_src>
import math
from functools import partial

import jax
import jax.numpy as jnp
from jax import lax
from jax.experimental import pallas as pl
from jax.experimental.pallas import tpu as pltpu


_NEG_BIG = -1e30                 # finite "minus infinity" for the causal mask


# ------------------------- per-generation configuration ------------------------

def _detect_vmem_capacity():
    try:
        info = pltpu.get_tpu_info()
        cap = getattr(info, "vmem_capacity_bytes", None)
        if cap:
            return int(cap)
    except Exception:
        pass
    return 128 * 1024 * 1024


_VMEM_CAP = _detect_vmem_capacity()
# v5e/v6e (128 MiB physical): ~100 MiB scoped limit; v7x (64 MiB): leave headroom.
_VMEM_LIMIT = (100 * 1024 * 1024) if _VMEM_CAP >= 128 * 1024 * 1024 \
    else (52 * 1024 * 1024)


def _detect_exp_dtype():
    try:
        kind = jax.devices()[0].device_kind.lower()
    except Exception:
        kind = ""
    # bf16 EUP exists on v6e / v7x; keep fp32 exponentials elsewhere (v5e, v4).
    if "v6" in kind or "v7" in kind:
        return jnp.bfloat16
    return jnp.float32


_EXP_DTYPE = _detect_exp_dtype()
# Single-buffer constant-index weight specs (saves VMEM, esp. on v7x).
_WEIGHT_PIPELINE = {"pipeline_mode": pl.Buffered(1)} if hasattr(pl, "Buffered") else {}


def _seq_tile(T):
    pref = 512 if _VMEM_CAP >= 128 * 1024 * 1024 else 256
    for t in (pref, 256, 128):
        if T >= t and T % t == 0:
            return t
    return T


def _vocab_padding(V):
    """(padded_vocab, vocab_tile) - lane-dense and tile-divisible."""
    vp = ((V + 127) // 128) * 128
    if vp <= 2048:
        return vp, vp
    vt = 2048
    return ((V + vt - 1) // vt) * vt, vt


# ----------------------------- in-kernel helpers -----------------------------

def _layernorm(x, w, b, eps=1e-5):
    # PyTorch nn.LayerNorm semantics (biased variance, eps inside sqrt), fp32.
    mu = jnp.mean(x, axis=-1, keepdims=True)
    var = jnp.mean((x - mu) ** 2, axis=-1, keepdims=True)
    return (x - mu) * lax.rsqrt(var + eps) * w + b


def _gelu_tanh(x):
    # nn.GELU(approximate='tanh'), fp32.
    c = math.sqrt(2.0 / math.pi)
    return 0.5 * x * (1.0 + jnp.tanh(c * (x + 0.044715 * x * x * x)))


# ------------------------------ Pallas kernels -------------------------------

def kv_kernel(n_head, x_ref, ln1w_ref, ln1b_ref, wkv_ref, bkv_ref, k_ref, v_ref):
    """ln_1 + K/V projection for one (batch, seq-tile); head-major bf16 outputs."""
    x = x_ref[0]                                            # (TT, C) fp32
    tt, C = x.shape
    hd = C // n_head

    h = _layernorm(x, ln1w_ref[...], ln1b_ref[...])
    kv = jnp.dot(h.astype(jnp.bfloat16), wkv_ref[...],
                 preferred_element_type=jnp.float32) + bkv_ref[...]   # (TT, 2C)

    # single stack + single store per tensor (no per-head store loop)
    k_ref[0] = jnp.stack([kv[:, hh * hd:(hh + 1) * hd]
                          for hh in range(n_head)], axis=0).astype(k_ref.dtype)
    v_ref[0] = jnp.stack([kv[:, C + hh * hd:C + (hh + 1) * hd]
                          for hh in range(n_head)], axis=0).astype(v_ref.dtype)


def attn_mlp_kernel(n_head, exp_dtype, scale,
                    x_ref, k_ref, v_ref,
                    ln1w_ref, ln1b_ref, wq_ref, bq_ref,
                    wproj_ref, bproj_ref,
                    ln2w_ref, ln2b_ref, wfc_ref, bfc_ref, wfc2_ref, bfc2_ref,
                    o_ref, m_sc, l_sc, acc_sc):
    """Fused: Q projection + flash causal attention + c_proj + residual + MLP.

    grid = (B, NQ).  k_ref / v_ref hold the whole sequence (constant index_map,
    so they are DMA'd once per batch element).  Only KV tiles <= the current Q
    tile are ever read; the causal mask is applied on the diagonal tile only.
    """
    i = pl.program_id(1)
    x = x_ref[0]                                            # (TQ, C) fp32
    t_q, C = x.shape
    hd = C // n_head
    t_k = t_q                                               # square tiles

    # ---- ln_1 + Q projection (1/sqrt(hd) folded in); Q never touches HBM ----
    h = _layernorm(x, ln1w_ref[...], ln1b_ref[...])
    q2d = (jnp.dot(h.astype(jnp.bfloat16), wq_ref[...],
                   preferred_element_type=jnp.float32) + bq_ref[...]) * scale
    q = jnp.stack([q2d[:, hh * hd:(hh + 1) * hd] for hh in range(n_head)],
                  axis=0).astype(jnp.bfloat16)              # (H, TQ, hd)

    # ---- online-softmax accumulators (re-initialised every grid step) ----
    m_sc[...] = jnp.full_like(m_sc, _NEG_BIG)
    l_sc[...] = jnp.zeros_like(l_sc)
    acc_sc[...] = jnp.zeros_like(acc_sc)

    def online_step(kb, vb, mask):
        # head-batched scores, fp32 accumulation on the MXU: (H, TQ, TK)
        s = lax.dot_general(q, kb, (((2,), (2,)), ((0,), (0,))),
                            preferred_element_type=jnp.float32)
        if mask is not None:
            s = jnp.where(mask, s, _NEG_BIG)
        m_prev = m_sc[...]
        m_new = jnp.maximum(m_prev, jnp.max(s, axis=-1, keepdims=True))
        alpha = jnp.exp(m_prev - m_new)
        p = jnp.exp((s - m_new).astype(exp_dtype))          # bf16 EUP on v6e/v7x
        l_sc[...] = alpha * l_sc[...] + jnp.sum(p.astype(jnp.float32),
                                                axis=-1, keepdims=True)
        acc_sc[...] = alpha * acc_sc[...] + lax.dot_general(
            p.astype(jnp.bfloat16), vb, (((2,), (1,)), ((0,), (0,))),
            preferred_element_type=jnp.float32)
        m_sc[...] = m_new

    def visible_tile(kv, carry):
        off = pl.multiple_of(kv * t_k, t_k)
        online_step(k_ref[0, :, pl.ds(off, t_k), :],
                    v_ref[0, :, pl.ds(off, t_k), :], None)
        return carry

    # fully-visible KV tiles (0..i-1): no mask, dynamic trip count
    lax.fori_loop(0, i, visible_tile, 0)

    # diagonal (straddling) tile: static lower-triangular mask
    off = pl.multiple_of(i * t_k, t_k)
    rows = lax.broadcasted_iota(jnp.int32, (t_q, t_k), 0)
    cols = lax.broadcasted_iota(jnp.int32, (t_q, t_k), 1)
    online_step(k_ref[0, :, pl.ds(off, t_k), :],
                v_ref[0, :, pl.ds(off, t_k), :],
                (rows >= cols)[None, :, :])

    # ---- epilogue: normalise, concat heads, c_proj, residual, fused MLP ----
    y = acc_sc[...] * pl.reciprocal(l_sc[...], approx=True)           # (H, TQ, hd)
    y2d = jnp.concatenate([y[hh] for hh in range(n_head)], axis=-1)   # (TQ, C)
    attn_out = jnp.dot(y2d.astype(jnp.bfloat16), wproj_ref[...],
                       preferred_element_type=jnp.float32) + bproj_ref[...]
    x1 = x + attn_out                                                 # residual 1

    h2 = _layernorm(x1, ln2w_ref[...], ln2b_ref[...])
    h2 = jnp.dot(h2.astype(jnp.bfloat16), wfc_ref[...],
                 preferred_element_type=jnp.float32) + bfc_ref[...]
    h2 = _gelu_tanh(h2)
    h2 = jnp.dot(h2.astype(jnp.bfloat16), wfc2_ref[...],
                 preferred_element_type=jnp.float32) + bfc2_ref[...]
    o_ref[0] = x1 + h2                                                # residual 2


def head_kernel(x_ref, lnfw_ref, lnfb_ref, wte_ref, o_ref, xln_sc):
    """Final LayerNorm + tied lm_head, tiled over the (padded) vocab dimension.
    LN is computed once per batch element (v == 0) into VMEM scratch; each step
    contracts it with a lane-dense (TV, C) bf16 slab of wte (no transpose)."""
    @pl.when(pl.program_id(1) == 0)
    def _():
        xln_sc[...] = _layernorm(x_ref[0], lnfw_ref[...], lnfb_ref[...]
                                 ).astype(xln_sc.dtype)

    o_ref[0] = lax.dot_general(xln_sc[...], wte_ref[...],
                               (((1,), (1,)), ((), ())),
                               preferred_element_type=jnp.float32)


# ------------------------------ pallas wrappers -------------------------------

def _rep_spec(a):
    """Whole-array BlockSpec, constant over the 2-D grid, single-buffered."""
    zeros = (0,) * a.ndim
    return pl.BlockSpec(a.shape, lambda b, t: zeros, **_WEIGHT_PIPELINE)


def run_kv(x, lp, n_head, t_tile):
    B, T, C = x.shape
    hd = C // n_head
    out_sds = jax.ShapeDtypeStruct((B, n_head, T, hd), jnp.bfloat16)
    out_spec = pl.BlockSpec((1, n_head, t_tile, hd), lambda b, t: (b, 0, t, 0))
    return pl.pallas_call(
        partial(kv_kernel, n_head),
        out_shape=(out_sds, out_sds),
        grid=(B, T // t_tile),
        in_specs=[pl.BlockSpec((1, t_tile, C), lambda b, t: (b, t, 0)),
                  _rep_spec(lp['ln1_w']), _rep_spec(lp['ln1_b']),
                  _rep_spec(lp['w_kv']), _rep_spec(lp['b_kv'])],
        out_specs=(out_spec, out_spec),
        compiler_params=pltpu.CompilerParams(
            dimension_semantics=("parallel", "parallel"),
            vmem_limit_bytes=_VMEM_LIMIT),
    )(x, lp['ln1_w'], lp['ln1_b'], lp['w_kv'], lp['b_kv'])


def run_attn_mlp(x, k, v, lp, n_head, t_tile):
    B, T, C = x.shape
    hd = C // n_head
    scale = 1.0 / math.sqrt(hd)
    # whole-sequence K/V, constant index_map -> fetched once per batch element
    kv_spec = pl.BlockSpec((1, n_head, T, hd), lambda b, i: (b, 0, 0, 0))
    return pl.pallas_call(
        partial(attn_mlp_kernel, n_head, _EXP_DTYPE, scale),
        out_shape=jax.ShapeDtypeStruct((B, T, C), jnp.float32),
        grid=(B, T // t_tile),
        in_specs=[pl.BlockSpec((1, t_tile, C), lambda b, i: (b, i, 0)),
                  kv_spec, kv_spec,
                  _rep_spec(lp['ln1_w']), _rep_spec(lp['ln1_b']),
                  _rep_spec(lp['w_q']), _rep_spec(lp['b_q']),
                  _rep_spec(lp['w_proj']), _rep_spec(lp['b_proj']),
                  _rep_spec(lp['ln2_w']), _rep_spec(lp['ln2_b']),
                  _rep_spec(lp['w_fc']), _rep_spec(lp['b_fc']),
                  _rep_spec(lp['w_fc2']), _rep_spec(lp['b_fc2'])],
        out_specs=pl.BlockSpec((1, t_tile, C), lambda b, i: (b, i, 0)),
        scratch_shapes=[pltpu.VMEM((n_head, t_tile, 1), jnp.float32),
                        pltpu.VMEM((n_head, t_tile, 1), jnp.float32),
                        pltpu.VMEM((n_head, t_tile, hd), jnp.float32)],
        compiler_params=pltpu.CompilerParams(
            dimension_semantics=("parallel", "parallel"),
            vmem_limit_bytes=_VMEM_LIMIT),
    )(x, k, v, lp['ln1_w'], lp['ln1_b'], lp['w_q'], lp['b_q'],
      lp['w_proj'], lp['b_proj'], lp['ln2_w'], lp['ln2_b'],
      lp['w_fc'], lp['b_fc'], lp['w_fc2'], lp['b_fc2'])


def run_head(x, lnf_w, lnf_b, wte_b16, v_tile):
    B, T, C = x.shape
    Vp = wte_b16.shape[0]
    return pl.pallas_call(
        head_kernel,
        out_shape=jax.ShapeDtypeStruct((B, T, Vp), jnp.float32),
        grid=(B, Vp // v_tile),
        in_specs=[pl.BlockSpec((1, T, C), lambda b, v: (b, 0, 0)),
                  _rep_spec(lnf_w), _rep_spec(lnf_b),
                  pl.BlockSpec((v_tile, C), lambda b, v: (v, 0))],
        out_specs=pl.BlockSpec((1, T, v_tile), lambda b, v: (b, 0, v)),
        scratch_shapes=[pltpu.VMEM((T, C), jnp.bfloat16)],
        compiler_params=pltpu.CompilerParams(
            dimension_semantics=("parallel", "arbitrary"),
            vmem_limit_bytes=_VMEM_LIMIT),
    )(x, lnf_w, lnf_b, wte_b16)


# --------------------------------- GPT model ----------------------------------

def init_params(key, cfg):
    V, C = cfg['vocab_size'], cfg['n_embd']
    L, S = cfg['n_layer'], cfg['block_size']
    Vp, _ = _vocab_padding(V)
    std = 0.02
    proj_std = 0.02 * (2 * L) ** -0.5            # NANOGPT_SCALE_INIT
    keys = iter(jax.random.split(key, 2 + 4 * L))
    nk = lambda: next(keys)

    wte = std * jax.random.normal(nk(), (V, C), jnp.float32)
    wte = jnp.pad(wte, ((0, Vp - V), (0, 0))).astype(jnp.bfloat16)   # tied, bf16

    params = {
        'wte': wte,                              # (Vp, C) bf16: embedding + lm_head
        'wpe': std * jax.random.normal(nk(), (S, C), jnp.float32),
        'lnf_w': jnp.ones((1, C), jnp.float32),
        'lnf_b': jnp.zeros((1, C), jnp.float32),
        'blocks': [],
    }
    for _ in range(L):
        w_qkv = std * jax.random.normal(nk(), (C, 3 * C), jnp.float32)
        params['blocks'].append({
            'ln1_w': jnp.ones((1, C), jnp.float32),
            'ln1_b': jnp.zeros((1, C), jnp.float32),
            'w_q': w_qkv[:, :C].astype(jnp.bfloat16),
            'b_q': jnp.zeros((1, C), jnp.float32),
            'w_kv': w_qkv[:, C:].astype(jnp.bfloat16),
            'b_kv': jnp.zeros((1, 2 * C), jnp.float32),
            'w_proj': (proj_std * jax.random.normal(nk(), (C, C), jnp.float32)
                       ).astype(jnp.bfloat16),
            'b_proj': jnp.zeros((1, C), jnp.float32),
            'ln2_w': jnp.ones((1, C), jnp.float32),
            'ln2_b': jnp.zeros((1, C), jnp.float32),
            'w_fc': (std * jax.random.normal(nk(), (C, 4 * C), jnp.float32)
                     ).astype(jnp.bfloat16),
            'b_fc': jnp.zeros((1, 4 * C), jnp.float32),
            'w_fc2': (proj_std * jax.random.normal(nk(), (4 * C, C), jnp.float32)
                      ).astype(jnp.bfloat16),
            'b_fc2': jnp.zeros((1, C), jnp.float32),
        })
    return params


def gpt_forward(idx, params, cfg, targets=None):
    B, T = idx.shape
    assert T <= cfg['block_size'], 'Cannot forward, model block size is exhausted.'
    V = cfg['vocab_size']
    n_head = cfg['n_head']
    t_tile = _seq_tile(T)

    # embedding gather + positional add (plain-JAX glue)
    tok = jnp.take(params['wte'], idx, axis=0).astype(jnp.float32)   # (B, T, C)
    x = tok + params['wpe'][:T][None, :, :]

    for lp in params['blocks']:
        k, v = run_kv(x, lp, n_head, t_tile)
        x = run_attn_mlp(x, k, v, lp, n_head, t_tile)

    _, v_tile = _vocab_padding(V)
    logits = run_head(x, params['lnf_w'], params['lnf_b'], params['wte'], v_tile)
    logits = logits[:, :, :V]                                # drop vocab padding

    loss = None
    if targets is not None:
        # TODO(synk): cross-entropy / logsumexp kept in plain JAX (could be fused
        # into head_kernel as an online-logsumexp to avoid the logits re-read).
        logp = jax.nn.log_softmax(logits, axis=-1)
        loss = -jnp.mean(jnp.take_along_axis(logp, targets[..., None], axis=-1))
    return logits, loss


# ------------------------------------ main -------------------------------------

if __name__ == "__main__":
    cfg = dict(block_size=16, vocab_size=128, n_layer=2, n_head=2, n_embd=32)
    B, T = 2, 8

    key = jax.random.PRNGKey(0)
    pkey, ikey = jax.random.split(key)
    params = init_params(pkey, cfg)
    idx = jax.random.randint(ikey, (B, T), 0, cfg['vocab_size'], dtype=jnp.int32)

    fwd = jax.jit(partial(gpt_forward, cfg=cfg))
    logits, loss = fwd(idx, params)
    logits = jax.block_until_ready(logits)

    assert logits.shape == (B, T, cfg['vocab_size'])
    assert bool(jnp.all(jnp.isfinite(logits)))
    print("KERNEL_OK")
</pallas_src>

<mosaic_0001>
module attributes {stable_mosaic.version = 11 : i64} {
  func.func @kv_kernel(%arg0: i32, %arg1: i32, %arg2: memref<1x8x32xf32, #tpu.memory_space<vmem>>, %arg3: memref<1x32xf32, #tpu.memory_space<vmem>>, %arg4: memref<1x32xf32, #tpu.memory_space<vmem>>, %arg5: memref<32x64xbf16, #tpu.memory_space<vmem>>, %arg6: memref<1x64xf32, #tpu.memory_space<vmem>>, %arg7: memref<1x2x8x16xbf16, #tpu.memory_space<vmem>>, %arg8: memref<1x2x8x16xbf16, #tpu.memory_space<vmem>>) attributes {dimension_semantics = [#tpu.dimension_semantics<parallel>, #tpu.dimension_semantics<parallel>], iteration_bounds = array<i64: 2, 1>, scalar_prefetch = 0 : i64, scratch_operands = 0 : i64, tpu.core_type = #tpu.core_type<tc>, window_params = [{transform_indices = @transform_0, window_bounds = array<i64: 1, 8, 32>}, {pipeline_mode = #tpu.pipeline_mode<synchronous>, transform_indices = @transform_1, window_bounds = array<i64: 1, 32>}, {pipeline_mode = #tpu.pipeline_mode<synchronous>, transform_indices = @transform_2, window_bounds = array<i64: 1, 32>}, {pipeline_mode = #tpu.pipeline_mode<synchronous>, transform_indices = @transform_3, window_bounds = array<i64: 32, 64>}, {pipeline_mode = #tpu.pipeline_mode<synchronous>, transform_indices = @transform_4, window_bounds = array<i64: 1, 64>}, {transform_indices = @transform_5, window_bounds = array<i64: 1, 2, 8, 16>}, {transform_indices = @transform_6, window_bounds = array<i64: 1, 2, 8, 16>}]} {
    %c0 = arith.constant 0 : index
    %c0_0 = arith.constant 0 : index
    %c0_1 = arith.constant 0 : index
    %0 = vector.load %arg2[%c0, %c0_0, %c0_1] : memref<1x8x32xf32, #tpu.memory_space<vmem>>, vector<1x8x32xf32>
    %1 = vector.shape_cast %0 : vector<1x8x32xf32> to vector<8x32xf32>
    %c0_2 = arith.constant 0 : index
    %c0_3 = arith.constant 0 : index
    %2 = vector.load %arg3[%c0_2, %c0_3] : memref<1x32xf32, #tpu.memory_space<vmem>>, vector<1x32xf32>
    %c0_4 = arith.constant 0 : index
    %c0_5 = arith.constant 0 : index
    %3 = vector.load %arg4[%c0_4, %c0_5] : memref<1x32xf32, #tpu.memory_space<vmem>>, vector<1x32xf32>
    %cst = arith.constant dense<0.000000e+00> : vector<8xf32>
    %4 = vector.multi_reduction <add>, %1, %cst [1] : vector<8x32xf32> to vector<8xf32>
    %5 = vector.shape_cast %4 : vector<8xf32> to vector<8x1xf32>
    %cst_6 = arith.constant 3.200000e+01 : f32
    %6 = vector.broadcast %cst_6 : f32 to vector<8x1xf32>
    %7 = arith.divf %5, %6 : vector<8x1xf32>
    %8 = vector.broadcast %7 : vector<8x1xf32> to vector<8x32xf32>
    %9 = arith.subf %1, %8 : vector<8x32xf32>
    %10 = arith.mulf %9, %9 : vector<8x32xf32>
    %cst_7 = arith.constant dense<0.000000e+00> : vector<8xf32>
    %11 = vector.multi_reduction <add>, %10, %cst_7 [1] : vector<8x32xf32> to vector<8xf32>
    %12 = vector.shape_cast %11 : vector<8xf32> to vector<8x1xf32>
    %cst_8 = arith.constant 3.200000e+01 : f32
    %13 = vector.broadcast %cst_8 : f32 to vector<8x1xf32>
    %14 = arith.divf %12, %13 : vector<8x1xf32>
    %15 = vector.broadcast %7 : vector<8x1xf32> to vector<8x32xf32>
    %16 = arith.subf %1, %15 : vector<8x32xf32>
    %cst_9 = arith.constant 9.99999974E-6 : f32
    %17 = vector.broadcast %cst_9 : f32 to vector<8x1xf32>
    %18 = arith.addf %14, %17 : vector<8x1xf32>
    %19 = math.rsqrt %18 : vector<8x1xf32>
    %20 = vector.broadcast %19 : vector<8x1xf32> to vector<8x32xf32>
    %21 = arith.mulf %16, %20 : vector<8x32xf32>
    %22 = vector.broadcast %2 : vector<1x32xf32> to vector<8x32xf32>
    %23 = arith.mulf %21, %22 : vector<8x32xf32>
    %24 = vector.broadcast %3 : vector<1x32xf32> to vector<8x32xf32>
    %25 = arith.addf %23, %24 : vector<8x32xf32>
    %26 = arith.truncf %25 : vector<8x32xf32> to vector<8x32xbf16>
    %c0_10 = arith.constant 0 : index
    %c0_11 = arith.constant 0 : index
    %27 = vector.load %arg5[%c0_10, %c0_11] : memref<32x64xbf16, #tpu.memory_space<vmem>>, vector<32x64xbf16>
    %cst_12 = arith.constant dense<0.000000e+00> : vector<8x64xf32>
    %28 = tpu.matmul %26, %27, %cst_12 {dimension_numbers = #tpu.dot_dimension_numbers<[1], [0], [0], [1], [0, 0, 1, 1], [], []>} : vector<8x32xbf16>, vector<32x64xbf16>, vector<8x64xf32> -> vector<8x64xf32>
    %c0_13 = arith.constant 0 : index
    %c0_14 = arith.constant 0 : index
    %29 = vector.load %arg6[%c0_13, %c0_14] : memref<1x64xf32, #tpu.memory_space<vmem>>, vector<1x64xf32>
    %30 = vector.broadcast %29 : vector<1x64xf32> to vector<8x64xf32>
    %31 = arith.addf %28, %30 : vector<8x64xf32>
    %32 = vector.extract_strided_slice %31 {offsets = [0, 0], sizes = [8, 16], strides = [1, 1]} : vector<8x64xf32> to vector<8x16xf32>
    %33 = vector.extract_strided_slice %31 {offsets = [0, 16], sizes = [8, 16], strides = [1, 1]} : vector<8x64xf32> to vector<8x16xf32>
    %34 = vector.shape_cast %32 : vector<8x16xf32> to vector<1x8x16xf32>
    %35 = vector.shape_cast %33 : vector<8x16xf32> to vector<1x8x16xf32>
    %36 = tpu.concatenate %34, %35 in 0 : vector<1x8x16xf32>, vector<1x8x16xf32> -> vector<2x8x16xf32>
    %37 = arith.truncf %36 : vector<2x8x16xf32> to vector<2x8x16xbf16>
    %c0_15 = arith.constant 0 : index
    %c0_16 = arith.constant 0 : index
    %c0_17 = arith.constant 0 : index
    %c0_18 = arith.constant 0 : index
    %38 = vector.load %arg7[%c0_15, %c0_16, %c0_17, %c0_18] : memref<1x2x8x16xbf16, #tpu.memory_space<vmem>>, vector<1x2x8x16xbf16>
    %39 = vector.shape_cast %38 : vector<1x2x8x16xbf16> to vector<2x8x16xbf16>
    %40 = vector.shape_cast %37 : vector<2x8x16xbf16> to vector<1x2x8x16xbf16>
    tpu.vector_store %arg7[%c0_15, %c0_16, %c0_17, %c0_18], %40 {strides = array<i32>} : memref<1x2x8x16xbf16, #tpu.memory_space<vmem>>, vector<1x2x8x16xbf16>,
    %41 = vector.extract_strided_slice %31 {offsets = [0, 32], sizes = [8, 16], strides = [1, 1]} : vector<8x64xf32> to vector<8x16xf32>
    %42 = vector.extract_strided_slice %31 {offsets = [0, 48], sizes = [8, 16], strides = [1, 1]} : vector<8x64xf32> to vector<8x16xf32>
    %43 = vector.shape_cast %41 : vector<8x16xf32> to vector<1x8x16xf32>
    %44 = vector.shape_cast %42 : vector<8x16xf32> to vector<1x8x16xf32>
    %45 = tpu.concatenate %43, %44 in 0 : vector<1x8x16xf32>, vector<1x8x16xf32> -> vector<2x8x16xf32>
    %46 = arith.truncf %45 : vector<2x8x16xf32> to vector<2x8x16xbf16>
    %c0_19 = arith.constant 0 : index
    %c0_20 = arith.constant 0 : index
    %c0_21 = arith.constant 0 : index
    %c0_22 = arith.constant 0 : index
    %47 = vector.load %arg8[%c0_19, %c0_20, %c0_21, %c0_22] : memref<1x2x8x16xbf16, #tpu.memory_space<vmem>>, vector<1x2x8x16xbf16>
    %48 = vector.shape_cast %47 : vector<1x2x8x16xbf16> to vector<2x8x16xbf16>
    %49 = vector.shape_cast %46 : vector<2x8x16xbf16> to vector<1x2x8x16xbf16>
    tpu.vector_store %arg8[%c0_19, %c0_20, %c0_21, %c0_22], %49 {strides = array<i32>} : memref<1x2x8x16xbf16, #tpu.memory_space<vmem>>, vector<1x2x8x16xbf16>,
    return
  }
  func.func @transform_0(%arg0: i32, %arg1: i32) -> (i32, i32, i32) {
    %c0_i32 = arith.constant 0 : i32
    %c0_i32_0 = arith.constant 0 : i32
    return %arg0, %arg1, %c0_i32 : i32, i32, i32
  }
  func.func @transform_1(%arg0: i32, %arg1: i32) -> (i32, i32) {
    %c0_i32 = arith.constant 0 : i32
    %c0_i32_0 = arith.constant 0 : i32
    %c0_i32_1 = arith.constant 0 : i32
    return %c0_i32, %c0_i32_0 : i32, i32
  }
  func.func @transform_2(%arg0: i32, %arg1: i32) -> (i32, i32) {
    %c0_i32 = arith.constant 0 : i32
    %c0_i32_0 = arith.constant 0 : i32
    %c0_i32_1 = arith.constant 0 : i32
    return %c0_i32, %c0_i32_0 : i32, i32
  }
  func.func @transform_3(%arg0: i32, %arg1: i32) -> (i32, i32) {
    %c0_i32 = arith.constant 0 : i32
    %c0_i32_0 = arith.constant 0 : i32
    %c0_i32_1 = arith.constant 0 : i32
    return %c0_i32, %c0_i32_0 : i32, i32
  }
  func.func @transform_4(%arg0: i32, %arg1: i32) -> (i32, i32) {
    %c0_i32 = arith.constant 0 : i32
    %c0_i32_0 = arith.constant 0 : i32
    %c0_i32_1 = arith.constant 0 : i32
    return %c0_i32, %c0_i32_0 : i32, i32
  }
  func.func @transform_5(%arg0: i32, %arg1: i32) -> (i32, i32, i32, i32) {
    %c0_i32 = arith.constant 0 : i32
    %c0_i32_0 = arith.constant 0 : i32
    %c0_i32_1 = arith.constant 0 : i32
    return %arg0, %c0_i32, %arg1, %c0_i32_0 : i32, i32, i32, i32
  }
  func.func @transform_6(%arg0: i32, %arg1: i32) -> (i32, i32, i32, i32) {
    %c0_i32 = arith.constant 0 : i32
    %c0_i32_0 = arith.constant 0 : i32
    %c0_i32_1 = arith.constant 0 : i32
    return %arg0, %c0_i32, %arg1, %c0_i32_0 : i32, i32, i32, i32
  }
}

module attributes {stable_mosaic.version = 11 : i64} {
  func.func @head_kernel(%arg0: i32, %arg1: i32, %arg2: memref<1x8x32xf32, #tpu.memory_space<vmem>>, %arg3: memref<1x32xf32, #tpu.memory_space<vmem>>, %arg4: memref<1x32xf32, #tpu.memory_space<vmem>>, %arg5: memref<128x32xbf16, #tpu.memory_space<vmem>>, %arg6: memref<1x8x128xf32, #tpu.memory_space<vmem>>, %arg7: memref<8x32xbf16, #tpu.memory_space<vmem>>) attributes {dimension_semantics = [#tpu.dimension_semantics<parallel>, #tpu.dimension_semantics<arbitrary>], iteration_bounds = array<i64: 2, 1>, scalar_prefetch = 0 : i64, scratch_operands = 1 : i64, tpu.core_type = #tpu.core_type<tc>, window_params = [{transform_indices = @transform_0, window_bounds = array<i64: 1, 8, 32>}, {pipeline_mode = #tpu.pipeline_mode<synchronous>, transform_indices = @transform_1, window_bounds = array<i64: 1, 32>}, {pipeline_mode = #tpu.pipeline_mode<synchronous>, transform_indices = @transform_2, window_bounds = array<i64: 1, 32>}, {transform_indices = @transform_3, window_bounds = array<i64: 128, 32>}, {transform_indices = @transform_4, window_bounds = array<i64: 1, 8, 128>}]} {
    %c0_i32 = arith.constant 0 : i32
    %0 = arith.cmpi eq, %arg1, %c0_i32 : i32
    %1 = arith.extui %0 : i1 to i32
    %c0_i32_0 = arith.constant 0 : i32
    %2 = arith.cmpi ne, %1, %c0_i32_0 : i32
    scf.if %2 {
      %c0_7 = arith.constant 0 : index
      %c0_8 = arith.constant 0 : index
      %c0_9 = arith.constant 0 : index
      %9 = vector.load %arg2[%c0_7, %c0_8, %c0_9] : memref<1x8x32xf32, #tpu.memory_space<vmem>>, vector<1x8x32xf32>
      %10 = vector.shape_cast %9 : vector<1x8x32xf32> to vector<8x32xf32>
      %c0_10 = arith.constant 0 : index
      %c0_11 = arith.constant 0 : index
      %11 = vector.load %arg3[%c0_10, %c0_11] : memref<1x32xf32, #tpu.memory_space<vmem>>, vector<1x32xf32>
      %c0_12 = arith.constant 0 : index
      %c0_13 = arith.constant 0 : index
      %12 = vector.load %arg4[%c0_12, %c0_13] : memref<1x32xf32, #tpu.memory_space<vmem>>, vector<1x32xf32>
      %cst_14 = arith.constant dense<0.000000e+00> : vector<8xf32>
      %13 = vector.multi_reduction <add>, %10, %cst_14 [1] : vector<8x32xf32> to vector<8xf32>
      %14 = vector.shape_cast %13 : vector<8xf32> to vector<8x1xf32>
      %cst_15 = arith.constant 3.200000e+01 : f32
      %15 = vector.broadcast %cst_15 : f32 to vector<8x1xf32>
      %16 = arith.divf %14, %15 : vector<8x1xf32>
      %17 = vector.broadcast %16 : vector<8x1xf32> to vector<8x32xf32>
      %18 = arith.subf %10, %17 : vector<8x32xf32>
      %19 = arith.mulf %18, %18 : vector<8x32xf32>
      %cst_16 = arith.constant dense<0.000000e+00> : vector<8xf32>
      %20 = vector.multi_reduction <add>, %19, %cst_16 [1] : vector<8x32xf32> to vector<8xf32>
      %21 = vector.shape_cast %20 : vector<8xf32> to vector<8x1xf32>
      %cst_17 = arith.constant 3.200000e+01 : f32
      %22 = vector.broadcast %cst_17 : f32 to vector<8x1xf32>
      %23 = arith.divf %21, %22 : vector<8x1xf32>
      %24 = vector.broadcast %16 : vector<8x1xf32> to vector<8x32xf32>
      %25 = arith.subf %10, %24 : vector<8x32xf32>
      %cst_18 = arith.constant 9.99999974E-6 : f32
      %26 = vector.broadcast %cst_18 : f32 to vector<8x1xf32>
      %27 = arith.addf %23, %26 : vector<8x1xf32>
      %28 = math.rsqrt %27 : vector<8x1xf32>
      %29 = vector.broadcast %28 : vector<8x1xf32> to vector<8x32xf32>
      %30 = arith.mulf %25, %29 : vector<8x32xf32>
      %31 = vector.broadcast %11 : vector<1x32xf32> to vector<8x32xf32>
      %32 = arith.mulf %30, %31 : vector<8x32xf32>
      %33 = vector.broadcast %12 : vector<1x32xf32> to vector<8x32xf32>
      %34 = arith.addf %32, %33 : vector<8x32xf32>
      %35 = arith.truncf %34 : vector<8x32xf32> to vector<8x32xbf16>
      %c0_19 = arith.constant 0 : index
      %c0_20 = arith.constant 0 : index
      %36 = vector.load %arg7[%c0_19, %c0_20] : memref<8x32xbf16, #tpu.memory_space<vmem>>, vector<8x32xbf16>
      tpu.vector_store %arg7[%c0_19, %c0_20], %35 {strides = array<i32>} : memref<8x32xbf16, #tpu.memory_space<vmem>>, vector<8x32xbf16>,
    } else {
    }
    %c0 = arith.constant 0 : index
    %c0_1 = arith.constant 0 : index
    %3 = vector.load %arg7[%c0, %c0_1] : memref<8x32xbf16, #tpu.memory_space<vmem>>, vector<8x32xbf16>
    %c0_2 = arith.constant 0 : index
    %c0_3 = arith.constant 0 : index
    %4 = vector.load %arg5[%c0_2, %c0_3] : memref<128x32xbf16, #tpu.memory_space<vmem>>, vector<128x32xbf16>
    %cst = arith.constant dense<0.000000e+00> : vector<8x128xf32>
    %5 = tpu.matmul %3, %4, %cst {dimension_numbers = #tpu.dot_dimension_numbers<[1], [1], [0], [0], [0, 0, 1, 0], [], []>} : vector<8x32xbf16>, vector<128x32xbf16>, vector<8x128xf32> -> vector<8x128xf32>
    %c0_4 = arith.constant 0 : index
    %c0_5 = arith.constant 0 : index
    %c0_6 = arith.constant 0 : index
    %6 = vector.load %arg6[%c0_4, %c0_5, %c0_6] : memref<1x8x128xf32, #tpu.memory_space<vmem>>, vector<1x8x128xf32>
    %7 = vector.shape_cast %6 : vector<1x8x128xf32> to vector<8x128xf32>
    %8 = vector.shape_cast %5 : vector<8x128xf32> to vector<1x8x128xf32>
    tpu.vector_store %arg6[%c0_4, %c0_5, %c0_6], %8 {strides = array<i32>} : memref<1x8x128xf32, #tpu.memory_space<vmem>>, vector<1x8x128xf32>,
    return
  }
  func.func @transform_0(%arg0: i32, %arg1: i32) -> (i32, i32, i32) {
    %c0_i32 = arith.constant 0 : i32
    %c0_i32_0 = arith.constant 0 : i32
    %c0_i32_1 = arith.constant 0 : i32
    return %arg0, %c0_i32, %c0_i32_0 : i32, i32, i32
  }
  func.func @transform_1(%arg0: i32, %arg1: i32) -> (i32, i32) {
    %c0_i32 = arith.constant 0 : i32
    %c0_i32_0 = arith.constant 0 : i32
    %c0_i32_1 = arith.constant 0 : i32
    return %c0_i32, %c0_i32_0 : i32, i32
  }
  func.func @transform_2(%arg0: i32, %arg1: i32) -> (i32, i32) {
    %c0_i32 = arith.constant 0 : i32
    %c0_i32_0 = arith.constant 0 : i32
    %c0_i32_1 = arith.constant 0 : i32
    return %c0_i32, %c0_i32_0 : i32, i32
  }
  func.func @transform_3(%arg0: i32, %arg1: i32) -> (i32, i32) {
    %c0_i32 = arith.constant 0 : i32
    %c0_i32_0 = arith.constant 0 : i32
    return %arg1, %c0_i32 : i32, i32
  }
  func.func @transform_4(%arg0: i32, %arg1: i32) -> (i32, i32, i32) {
    %c0_i32 = arith.constant 0 : i32
    %c0_i32_0 = arith.constant 0 : i32
    return %arg0, %c0_i32, %arg1 : i32, i32, i32
  }
}

module attributes {stable_mosaic.version = 11 : i64} {
  func.func @attn_mlp_kernel(%arg0: i32, %arg1: i32, %arg2: memref<1x8x32xf32, #tpu.memory_space<vmem>>, %arg3: memref<1x2x8x16xbf16, #tpu.memory_space<vmem>>, %arg4: memref<1x2x8x16xbf16, #tpu.memory_space<vmem>>, %arg5: memref<1x32xf32, #tpu.memory_space<vmem>>, %arg6: memref<1x32xf32, #tpu.memory_space<vmem>>, %arg7: memref<32x32xbf16, #tpu.memory_space<vmem>>, %arg8: memref<1x32xf32, #tpu.memory_space<vmem>>, %arg9: memref<32x32xbf16, #tpu.memory_space<vmem>>, %arg10: memref<1x32xf32, #tpu.memory_space<vmem>>, %arg11: memref<1x32xf32, #tpu.memory_space<vmem>>, %arg12: memref<1x32xf32, #tpu.memory_space<vmem>>, %arg13: memref<32x128xbf16, #tpu.memory_space<vmem>>, %arg14: memref<1x128xf32, #tpu.memory_space<vmem>>, %arg15: memref<128x32xbf16, #tpu.memory_space<vmem>>, %arg16: memref<1x32xf32, #tpu.memory_space<vmem>>, %arg17: memref<1x8x32xf32, #tpu.memory_space<vmem>>, %arg18: memref<2x8x1xf32, #tpu.memory_space<vmem>>, %arg19: memref<2x8x1xf32, #tpu.memory_space<vmem>>, %arg20: memref<2x8x16xf32, #tpu.memory_space<vmem>>) attributes {dimension_semantics = [#tpu.dimension_semantics<parallel>, #tpu.dimension_semantics<parallel>], iteration_bounds = array<i64: 2, 1>, scalar_prefetch = 0 : i64, scratch_operands = 3 : i64, tpu.core_type = #tpu.core_type<tc>, window_params = [{transform_indices = @transform_0, window_bounds = array<i64: 1, 8, 32>}, {transform_indices = @transform_1, window_bounds = array<i64: 1, 2, 8, 16>}, {transform_indices = @transform_2, window_bounds = array<i64: 1, 2, 8, 16>}, {pipeline_mode = #tpu.pipeline_mode<synchronous>, transform_indices = @transform_3, window_bounds = array<i64: 1, 32>}, {pipeline_mode = #tpu.pipeline_mode<synchronous>, transform_indices = @transform_4, window_bounds = array<i64: 1, 32>}, {pipeline_mode = #tpu.pipeline_mode<synchronous>, transform_indices = @transform_5, window_bounds = array<i64: 32, 32>}, {pipeline_mode = #tpu.pipeline_mode<synchronous>, transform_indices = @transform_6, window_bounds = array<i64: 1, 32>}, {pipeline_mode = #tpu.pipeline_mode<synchronous>, transform_indices = @transform_7, window_bounds = array<i64: 32, 32>}, {pipeline_mode = #tpu.pipeline_mode<synchronous>, transform_indices = @transform_8, window_bounds = array<i64: 1, 32>}, {pipeline_mode = #tpu.pipeline_mode<synchronous>, transform_indices = @transform_9, window_bounds = array<i64: 1, 32>}, {pipeline_mode = #tpu.pipeline_mode<synchronous>, transform_indices = @transform_10, window_bounds = array<i64: 1, 32>}, {pipeline_mode = #tpu.pipeline_mode<synchronous>, transform_indices = @transform_11, window_bounds = array<i64: 32, 128>}, {pipeline_mode = #tpu.pipeline_mode<synchronous>, transform_indices = @transform_12, window_bounds = array<i64: 1, 128>}, {pipeline_mode = #tpu.pipeline_mode<synchronous>, transform_indices = @transform_13, window_bounds = array<i64: 128, 32>}, {pipeline_mode = #tpu.pipeline_mode<synchronous>, transform_indices = @transform_14, window_bounds = array<i64: 1, 32>}, {transform_indices = @transform_15, window_bounds = array<i64: 1, 8, 32>}]} {
    %c0 = arith.constant 0 : index
    %c0_0 = arith.constant 0 : index
    %c0_1 = arith.constant 0 : index
    %0 = vector.load %arg2[%c0, %c0_0, %c0_1] : memref<1x8x32xf32, #tpu.memory_space<vmem>>, vector<1x8x32xf32>
    %1 = vector.shape_cast %0 : vector<1x8x32xf32> to vector<8x32xf32>
    %c0_2 = arith.constant 0 : index
    %c0_3 = arith.constant 0 : index
    %2 = vector.load %arg5[%c0_2, %c0_3] : memref<1x32xf32, #tpu.memory_space<vmem>>, vector<1x32xf32>
    %c0_4 = arith.constant 0 : index
    %c0_5 = arith.constant 0 : index
    %3 = vector.load %arg6[%c0_4, %c0_5] : memref<1x32xf32, #tpu.memory_space<vmem>>, vector<1x32xf32>
    %cst = arith.constant dense<0.000000e+00> : vector<8xf32>
    %4 = vector.multi_reduction <add>, %1, %cst [1] : vector<8x32xf32> to vector<8xf32>
    %5 = vector.shape_cast %4 : vector<8xf32> to vector<8x1xf32>
    %cst_6 = arith.constant 3.200000e+01 : f32
    %6 = vector.broadcast %cst_6 : f32 to vector<8x1xf32>
    %7 = arith.divf %5, %6 : vector<8x1xf32>
    %8 = vector.broadcast %7 : vector<8x1xf32> to vector<8x32xf32>
    %9 = arith.subf %1, %8 : vector<8x32xf32>
    %10 = arith.mulf %9, %9 : vector<8x32xf32>
    %cst_7 = arith.constant dense<0.000000e+00> : vector<8xf32>
    %11 = vector.multi_reduction <add>, %10, %cst_7 [1] : vector<8x32xf32> to vector<8xf32>
    %12 = vector.shape_cast %11 : vector<8xf32> to vector<8x1xf32>
    %cst_8 = arith.constant 3.200000e+01 : f32
    %13 = vector.broadcast %cst_8 : f32 to vector<8x1xf32>
    %14 = arith.divf %12, %13 : vector<8x1xf32>
    %15 = vector.broadcast %7 : vector<8x1xf32> to vector<8x32xf32>
    %16 = arith.subf %1, %15 : vector<8x32xf32>
    %cst_9 = arith.constant 9.99999974E-6 : f32
    %17 = vector.broadcast %cst_9 : f32 to vector<8x1xf32>
    %18 = arith.addf %14, %17 : vector<8x1xf32>
    %19 = math.rsqrt %18 : vector<8x1xf32>
    %20 = vector.broadcast %19 : vector<8x1xf32> to vector<8x32xf32>
    %21 = arith.mulf %16, %20 : vector<8x32xf32>
    %22 = vector.broadcast %2 : vector<1x32xf32> to vector<8x32xf32>
    %23 = arith.mulf %21, %22 : vector<8x32xf32>
    %24 = vector.broadcast %3 : vector<1x32xf32> to vector<8x32xf32>
    %25 = arith.addf %23, %24 : vector<8x32xf32>
    %26 = arith.truncf %25 : vector<8x32xf32> to vector<8x32xbf16>
    %c0_10 = arith.constant 0 : index
    %c0_11 = arith.constant 0 : index
    %27 = vector.load %arg7[%c0_10, %c0_11] : memref<32x32xbf16, #tpu.memory_space<vmem>>, vector<32x32xbf16>
    %cst_12 = arith.constant dense<0.000000e+00> : vector<8x32xf32>
    %28 = tpu.matmul %26, %27, %cst_12 {dimension_numbers = #tpu.dot_dimension_numbers<[1], [0], [0], [1], [0, 0, 1, 1], [], []>} : vector<8x32xbf16>, vector<32x32xbf16>, vector<8x32xf32> -> vector<8x32xf32>
    %c0_13 = arith.constant 0 : index
    %c0_14 = arith.constant 0 : index
    %29 = vector.load %arg8[%c0_13, %c0_14] : memref<1x32xf32, #tpu.memory_space<vmem>>, vector<1x32xf32>
    %30 = vector.broadcast %29 : vector<1x32xf32> to vector<8x32xf32>
    %31 = arith.addf %28, %30 : vector<8x32xf32>
    %cst_15 = arith.constant 2.500000e-01 : f32
    %32 = vector.broadcast %cst_15 : f32 to vector<8x32xf32>
    %33 = arith.mulf %31, %32 : vector<8x32xf32>
    %34 = vector.extract_strided_slice %33 {offsets = [0, 0], sizes = [8, 16], strides = [1, 1]} : vector<8x32xf32> to vector<8x16xf32>
    %35 = vector.extract_strided_slice %33 {offsets = [0, 16], sizes = [8, 16], strides = [1, 1]} : vector<8x32xf32> to vector<8x16xf32>
    %36 = vector.shape_cast %34 : vector<8x16xf32> to vector<1x8x16xf32>
    %37 = vector.shape_cast %35 : vector<8x16xf32> to vector<1x8x16xf32>
    %38 = tpu.concatenate %36, %37 in 0 : vector<1x8x16xf32>, vector<1x8x16xf32> -> vector<2x8x16xf32>
    %39 = arith.truncf %38 : vector<2x8x16xf32> to vector<2x8x16xbf16>
    %cst_16 = arith.constant -1.000000e+30 : f32
    %40 = vector.broadcast %cst_16 : f32 to vector<2x8x1xf32>
    %c0_17 = arith.constant 0 : index
    %c0_18 = arith.constant 0 : index
    %c0_19 = arith.constant 0 : index
    %41 = vector.load %arg18[%c0_17, %c0_18, %c0_19] : memref<2x8x1xf32, #tpu.memory_space<vmem>>, vector<2x8x1xf32>
    tpu.vector_store %arg18[%c0_17, %c0_18, %c0_19], %40 {strides = array<i32>} : memref<2x8x1xf32, #tpu.memory_space<vmem>>, vector<2x8x1xf32>,
    %cst_20 = arith.constant 0.000000e+00 : f32
    %42 = vector.broadcast %cst_20 : f32 to vector<2x8x1xf32>
    %c0_21 = arith.constant 0 : index
    %c0_22 = arith.constant 0 : index
    %c0_23 = arith.constant 0 : index
    %43 = vector.load %arg19[%c0_21, %c0_22, %c0_23] : memref<2x8x1xf32, #tpu.memory_space<vmem>>, vector<2x8x1xf32>
    tpu.vector_store %arg19[%c0_21, %c0_22, %c0_23], %42 {strides = array<i32>} : memref<2x8x1xf32, #tpu.memory_space<vmem>>, vector<2x8x1xf32>,
    %cst_24 = arith.constant 0.000000e+00 : f32
    %44 = vector.broadcast %cst_24 : f32 to vector<2x8x16xf32>
    %c0_25 = arith.constant 0 : index
    %c0_26 = arith.constant 0 : index
    %c0_27 = arith.constant 0 : index
    %45 = vector.load %arg20[%c0_25, %c0_26, %c0_27] : memref<2x8x16xf32, #tpu.memory_space<vmem>>, vector<2x8x16xf32>
    tpu.vector_store %arg20[%c0_25, %c0_26, %c0_27], %44 {strides = array<i32>} : memref<2x8x16xf32, #tpu.memory_space<vmem>>, vector<2x8x16xf32>,
    %c0_i32 = arith.constant 0 : i32
    %c0_i32_28 = arith.constant 0 : i32
    %46 = arith.subi %arg1, %c0_i32_28 : i32
    %47 = arith.addi %c0_i32_28, %46 : i32
    %c1_i32 = arith.constant 1 : i32
    scf.for %arg21 = %c0_i32_28 to %47 step %c1_i32  : i32 {
      %c8_i32_95 = arith.constant 8 : i32
      %158 = arith.muli %arg21, %c8_i32_95 : i32
      %159 = tpu.assume_multiple %158, 8 : i32
      %c0_96 = arith.constant 0 : index
      %c0_97 = arith.constant 0 : index
      %160 = arith.index_cast %159 : i32 to index
      %c0_98 = arith.constant 0 : index
      %161 = vector.load %arg3[%c0_96, %c0_97, %160, %c0_98] : memref<1x2x8x16xbf16, #tpu.memory_space<vmem>>, vector<1x2x8x16xbf16>
      %162 = vector.shape_cast %161 : vector<1x2x8x16xbf16> to vector<2x8x16xbf16>
      %c0_99 = arith.constant 0 : index
      %c0_100 = arith.constant 0 : index
      %163 = arith.index_cast %159 : i32 to index
      %c0_101 = arith.constant 0 : index
      %164 = vector.load %arg4[%c0_99, %c0_100, %163, %c0_101] : memref<1x2x8x16xbf16, #tpu.memory_space<vmem>>, vector<1x2x8x16xbf16>
      %165 = vector.shape_cast %164 : vector<1x2x8x16xbf16> to vector<2x8x16xbf16>
      %cst_102 = arith.constant dense<0.000000e+00> : vector<2x8x8xf32>
      %166 = tpu.matmul %39, %162, %cst_102 {dimension_numbers = #tpu.dot_dimension_numbers<[2], [2], [1], [1], [0, 0, 0, 1, 1, 1], [0], [0]>} : vector<2x8x16xbf16>, vector<2x8x16xbf16>, vector<2x8x8xf32> -> vector<2x8x8xf32>
      %c0_103 = arith.constant 0 : index
      %c0_104 = arith.constant 0 : index
      %c0_105 = arith.constant 0 : index
      %167 = vector.load %arg18[%c0_103, %c0_104, %c0_105] : memref<2x8x1xf32, #tpu.memory_space<vmem>>, vector<2x8x1xf32>
      %cst_106 = arith.constant dense<0xFF800000> : vector<2x8xf32>
      %168 = vector.multi_reduction <maximumf>, %166, %cst_106 [2] : vector<2x8x8xf32> to vector<2x8xf32>
      %169 = vector.shape_cast %168 : vector<2x8xf32> to vector<2x8x1xf32>
      %170 = arith.maximumf %167, %169 : vector<2x8x1xf32>
      %171 = arith.subf %167, %170 : vector<2x8x1xf32>
      %172 = math.exp %171 : vector<2x8x1xf32>
      %173 = vector.broadcast %170 : vector<2x8x1xf32> to vector<2x8x8xf32>
      %174 = arith.subf %166, %173 : vector<2x8x8xf32>
      %175 = math.exp %174 : vector<2x8x8xf32>
      %c0_107 = arith.constant 0 : index
      %c0_108 = arith.constant 0 : index
      %c0_109 = arith.constant 0 : index
      %176 = vector.load %arg19[%c0_107, %c0_108, %c0_109] : memref<2x8x1xf32, #tpu.memory_space<vmem>>, vector<2x8x1xf32>
      %177 = arith.mulf %172, %176 : vector<2x8x1xf32>
      %cst_110 = arith.constant dense<0.000000e+00> : vector<2x8xf32>
      %178 = vector.multi_reduction <add>, %175, %cst_110 [2] : vector<2x8x8xf32> to vector<2x8xf32>
      %179 = vector.shape_cast %178 : vector<2x8xf32> to vector<2x8x1xf32>
      %180 = arith.addf %177, %179 : vector<2x8x1xf32>
      %c0_111 = arith.constant 0 : index
      %c0_112 = arith.constant 0 : index
      %c0_113 = arith.constant 0 : index
      %181 = vector.load %arg19[%c0_111, %c0_112, %c0_113] : memref<2x8x1xf32, #tpu.memory_space<vmem>>, vector<2x8x1xf32>
      tpu.vector_store %arg19[%c0_111, %c0_112, %c0_113], %180 {strides = array<i32>} : memref<2x8x1xf32, #tpu.memory_space<vmem>>, vector<2x8x1xf32>,
      %c0_114 = arith.constant 0 : index
      %c0_115 = arith.constant 0 : index
      %c0_116 = arith.constant 0 : index
      %182 = vector.load %arg20[%c0_114, %c0_115, %c0_116] : memref<2x8x16xf32, #tpu.memory_space<vmem>>, vector<2x8x16xf32>
      %183 = vector.broadcast %172 : vector<2x8x1xf32> to vector<2x8x16xf32>
      %184 = arith.mulf %183, %182 : vector<2x8x16xf32>
      %185 = arith.truncf %175 : vector<2x8x8xf32> to vector<2x8x8xbf16>
      %cst_117 = arith.constant dense<0.000000e+00> : vector<2x8x16xf32>
      %186 = tpu.matmul %185, %165, %cst_117 {dimension_numbers = #tpu.dot_dimension_numbers<[2], [1], [1], [2], [0, 0, 0, 1, 1, 2], [0], [0]>} : vector<2x8x8xbf16>, vector<2x8x16xbf16>, vector<2x8x16xf32> -> vector<2x8x16xf32>
      %187 = arith.addf %184, %186 : vector<2x8x16xf32>
      %c0_118 = arith.constant 0 : index
      %c0_119 = arith.constant 0 : index
      %c0_120 = arith.constant 0 : index
      %188 = vector.load %arg20[%c0_118, %c0_119, %c0_120] : memref<2x8x16xf32, #tpu.memory_space<vmem>>, vector<2x8x16xf32>
      tpu.vector_store %arg20[%c0_118, %c0_119, %c0_120], %187 {strides = array<i32>} : memref<2x8x16xf32, #tpu.memory_space<vmem>>, vector<2x8x16xf32>,
      %c0_121 = arith.constant 0 : index
      %c0_122 = arith.constant 0 : index
      %c0_123 = arith.constant 0 : index
      %189 = vector.load %arg18[%c0_121, %c0_122, %c0_123] : memref<2x8x1xf32, #tpu.memory_space<vmem>>, vector<2x8x1xf32>
      tpu.vector_store %arg18[%c0_121, %c0_122, %c0_123], %170 {strides = array<i32>} : memref<2x8x1xf32, #tpu.memory_space<vmem>>, vector<2x8x1xf32>,
    }
    %c8_i32 = arith.constant 8 : i32
    %48 = arith.muli %arg1, %c8_i32 : i32
    %49 = tpu.assume_multiple %48, 8 : i32
    %50 = tpu.iota {dimensions = array<i32: 0>} : vector<8x8xi32>
    %51 = tpu.iota {dimensions = array<i32: 1>} : vector<8x8xi32>
    %c0_29 = arith.constant 0 : index
    %c0_30 = arith.constant 0 : index
    %52 = arith.index_cast %49 : i32 to index
    %c0_31 = arith.constant 0 : index
    %53 = vector.load %arg3[%c0_29, %c0_30, %52, %c0_31] : memref<1x2x8x16xbf16, #tpu.memory_space<vmem>>, vector<1x2x8x16xbf16>
    %54 = vector.shape_cast %53 : vector<1x2x8x16xbf16> to vector<2x8x16xbf16>
    %c0_32 = arith.constant 0 : index
    %c0_33 = arith.constant 0 : index
    %55 = arith.index_cast %49 : i32 to index
    %c0_34 = arith.constant 0 : index
    %56 = vector.load %arg4[%c0_32, %c0_33, %55, %c0_34] : memref<1x2x8x16xbf16, #tpu.memory_space<vmem>>, vector<1x2x8x16xbf16>
    %57 = vector.shape_cast %56 : vector<1x2x8x16xbf16> to vector<2x8x16xbf16>
    %58 = arith.cmpi sge, %50, %51 : vector<8x8xi32>
    %59 = vector.shape_cast %58 : vector<8x8xi1> to vector<1x8x8xi1>
    %cst_35 = arith.constant dense<0.000000e+00> : vector<2x8x8xf32>
    %60 = tpu.matmul %39, %54, %cst_35 {dimension_numbers = #tpu.dot_dimension_numbers<[2], [2], [1], [1], [0, 0, 0, 1, 1, 1], [0], [0]>} : vector<2x8x16xbf16>, vector<2x8x16xbf16>, vector<2x8x8xf32> -> vector<2x8x8xf32>
    %cst_36 = arith.constant -1.000000e+30 : f32
    %61 = vector.shape_cast %59 : vector<1x8x8xi1> to vector<1x8x8xi1>
    %62 = vector.broadcast %61 : vector<1x8x8xi1> to vector<2x8x8xi1>
    %63 = vector.broadcast %cst_36 : f32 to vector<2x8x8xf32>
    %64 = arith.select %62, %60, %63 : vector<2x8x8xi1>, vector<2x8x8xf32>
    %c0_37 = arith.constant 0 : index
    %c0_38 = arith.constant 0 : index
    %c0_39 = arith.constant 0 : index
    %65 = vector.load %arg18[%c0_37, %c0_38, %c0_39] : memref<2x8x1xf32, #tpu.memory_space<vmem>>, vector<2x8x1xf32>
    %cst_40 = arith.constant dense<0xFF800000> : vector<2x8xf32>
    %66 = vector.multi_reduction <maximumf>, %64, %cst_40 [2] : vector<2x8x8xf32> to vector<2x8xf32>
    %67 = vector.shape_cast %66 : vector<2x8xf32> to vector<2x8x1xf32>
    %68 = arith.maximumf %65, %67 : vector<2x8x1xf32>
    %69 = arith.subf %65, %68 : vector<2x8x1xf32>
    %70 = math.exp %69 : vector<2x8x1xf32>
    %71 = vector.broadcast %68 : vector<2x8x1xf32> to vector<2x8x8xf32>
    %72 = arith.subf %64, %71 : vector<2x8x8xf32>
    %73 = math.exp %72 : vector<2x8x8xf32>
    %c0_41 = arith.constant 0 : index
    %c0_42 = arith.constant 0 : index
    %c0_43 = arith.constant 0 : index
    %74 = vector.load %arg19[%c0_41, %c0_42, %c0_43] : memref<2x8x1xf32, #tpu.memory_space<vmem>>, vector<2x8x1xf32>
    %75 = arith.mulf %70, %74 : vector<2x8x1xf32>
    %cst_44 = arith.constant dense<0.000000e+00> : vector<2x8xf32>
    %76 = vector.multi_reduction <add>, %73, %cst_44 [2] : vector<2x8x8xf32> to vector<2x8xf32>
    %77 = vector.shape_cast %76 : vector<2x8xf32> to vector<2x8x1xf32>
    %78 = arith.addf %75, %77 : vector<2x8x1xf32>
    %c0_45 = arith.constant 0 : index
    %c0_46 = arith.constant 0 : index
    %c0_47 = arith.constant 0 : index
    %79 = vector.load %arg19[%c0_45, %c0_46, %c0_47] : memref<2x8x1xf32, #tpu.memory_space<vmem>>, vector<2x8x1xf32>
    tpu.vector_store %arg19[%c0_45, %c0_46, %c0_47], %78 {strides = array<i32>} : memref<2x8x1xf32, #tpu.memory_space<vmem>>, vector<2x8x1xf32>,
    %c0_48 = arith.constant 0 : index
    %c0_49 = arith.constant 0 : index
    %c0_50 = arith.constant 0 : index
    %80 = vector.load %arg20[%c0_48, %c0_49, %c0_50] : memref<2x8x16xf32, #tpu.memory_space<vmem>>, vector<2x8x16xf32>
    %81 = vector.broadcast %70 : vector<2x8x1xf32> to vector<2x8x16xf32>
    %82 = arith.mulf %81, %80 : vector<2x8x16xf32>
    %83 = arith.truncf %73 : vector<2x8x8xf32> to vector<2x8x8xbf16>
    %cst_51 = arith.constant dense<0.000000e+00> : vector<2x8x16xf32>
    %84 = tpu.matmul %83, %57, %cst_51 {dimension_numbers = #tpu.dot_dimension_numbers<[2], [1], [1], [2], [0, 0, 0, 1, 1, 2], [0], [0]>} : vector<2x8x8xbf16>, vector<2x8x16xbf16>, vector<2x8x16xf32> -> vector<2x8x16xf32>
    %85 = arith.addf %82, %84 : vector<2x8x16xf32>
    %c0_52 = arith.constant 0 : index
    %c0_53 = arith.constant 0 : index
    %c0_54 = arith.constant 0 : index
    %86 = vector.load %arg20[%c0_52, %c0_53, %c0_54] : memref<2x8x16xf32, #tpu.memory_space<vmem>>, vector<2x8x16xf32>
    tpu.vector_store %arg20[%c0_52, %c0_53, %c0_54], %85 {strides = array<i32>} : memref<2x8x16xf32, #tpu.memory_space<vmem>>, vector<2x8x16xf32>,
    %c0_55 = arith.constant 0 : index
    %c0_56 = arith.constant 0 : index
    %c0_57 = arith.constant 0 : index
    %87 = vector.load %arg18[%c0_55, %c0_56, %c0_57] : memref<2x8x1xf32, #tpu.memory_space<vmem>>, vector<2x8x1xf32>
    tpu.vector_store %arg18[%c0_55, %c0_56, %c0_57], %68 {strides = array<i32>} : memref<2x8x1xf32, #tpu.memory_space<vmem>>, vector<2x8x1xf32>,
    %c0_58 = arith.constant 0 : index
    %c0_59 = arith.constant 0 : index
    %c0_60 = arith.constant 0 : index
    %88 = vector.load %arg20[%c0_58, %c0_59, %c0_60] : memref<2x8x16xf32, #tpu.memory_space<vmem>>, vector<2x8x16xf32>
    %c0_61 = arith.constant 0 : index
    %c0_62 = arith.constant 0 : index
    %c0_63 = arith.constant 0 : index
    %89 = vector.load %arg19[%c0_61, %c0_62, %c0_63] : memref<2x8x1xf32, #tpu.memory_space<vmem>>, vector<2x8x1xf32>
    %90 = tpu.reciprocal %89 {approx = true} : vector<2x8x1xf32> -> vector<2x8x1xf32>
    %91 = vector.broadcast %90 : vector<2x8x1xf32> to vector<2x8x16xf32>
    %92 = arith.mulf %88, %91 : vector<2x8x16xf32>
    %93 = vector.extract_strided_slice %92 {offsets = [0, 0, 0], sizes = [1, 8, 16], strides = [1, 1, 1]} : vector<2x8x16xf32> to vector<1x8x16xf32>
    %94 = vector.shape_cast %93 : vector<1x8x16xf32> to vector<8x16xf32>
    %95 = vector.extract_strided_slice %92 {offsets = [1, 0, 0], sizes = [1, 8, 16], strides = [1, 1, 1]} : vector<2x8x16xf32> to vector<1x8x16xf32>
    %96 = vector.shape_cast %95 : vector<1x8x16xf32> to vector<8x16xf32>
    %97 = tpu.concatenate %94, %96 in 1 : vector<8x16xf32>, vector<8x16xf32> -> vector<8x32xf32>
    %98 = arith.truncf %97 : vector<8x32xf32> to vector<8x32xbf16>
    %c0_64 = arith.constant 0 : index
    %c0_65 = arith.constant 0 : index
    %99 = vector.load %arg9[%c0_64, %c0_65] : memref<32x32xbf16, #tpu.memory_space<vmem>>, vector<32x32xbf16>
    %cst_66 = arith.constant dense<0.000000e+00> : vector<8x32xf32>
    %100 = tpu.matmul %98, %99, %cst_66 {dimension_numbers = #tpu.dot_dimension_numbers<[1], [0], [0], [1], [0, 0, 1, 1], [], []>} : vector<8x32xbf16>, vector<32x32xbf16>, vector<8x32xf32> -> vector<8x32xf32>
    %c0_67 = arith.constant 0 : index
    %c0_68 = arith.constant 0 : index
    %101 = vector.load %arg10[%c0_67, %c0_68] : memref<1x32xf32, #tpu.memory_space<vmem>>, vector<1x32xf32>
    %102 = vector.broadcast %101 : vector<1x32xf32> to vector<8x32xf32>
    %103 = arith.addf %100, %102 : vector<8x32xf32>
    %104 = arith.addf %1, %103 : vector<8x32xf32>
    %c0_69 = arith.constant 0 : index
    %c0_70 = arith.constant 0 : index
    %105 = vector.load %arg11[%c0_69, %c0_70] : memref<1x32xf32, #tpu.memory_space<vmem>>, vector<1x32xf32>
    %c0_71 = arith.constant 0 : index
    %c0_72 = arith.constant 0 : index
    %106 = vector.load %arg12[%c0_71, %c0_72] : memref<1x32xf32, #tpu.memory_space<vmem>>, vector<1x32xf32>
    %cst_73 = arith.constant dense<0.000000e+00> : vector<8xf32>
    %107 = vector.multi_reduction <add>, %104, %cst_73 [1] : vector<8x32xf32> to vector<8xf32>
    %108 = vector.shape_cast %107 : vector<8xf32> to vector<8x1xf32>
    %cst_74 = arith.constant 3.200000e+01 : f32
    %109 = vector.broadcast %cst_74 : f32 to vector<8x1xf32>
    %110 = arith.divf %108, %109 : vector<8x1xf32>
    %111 = vector.broadcast %110 : vector<8x1xf32> to vector<8x32xf32>
    %112 = arith.subf %104, %111 : vector<8x32xf32>
    %113 = arith.mulf %112, %112 : vector<8x32xf32>
    %cst_75 = arith.constant dense<0.000000e+00> : vector<8xf32>
    %114 = vector.multi_reduction <add>, %113, %cst_75 [1] : vector<8x32xf32> to vector<8xf32>
    %115 = vector.shape_cast %114 : vector<8xf32> to vector<8x1xf32>
    %cst_76 = arith.constant 3.200000e+01 : f32
    %116 = vector.broadcast %cst_76 : f32 to vector<8x1xf32>
    %117 = arith.divf %115, %116 : vector<8x1xf32>
    %118 = vector.broadcast %110 : vector<8x1xf32> to vector<8x32xf32>
    %119 = arith.subf %104, %118 : vector<8x32xf32>
    %cst_77 = arith.constant 9.99999974E-6 : f32
    %120 = vector.broadcast %cst_77 : f32 to vector<8x1xf32>
    %121 = arith.addf %117, %120 : vector<8x1xf32>
    %122 = math.rsqrt %121 : vector<8x1xf32>
    %123 = vector.broadcast %122 : vector<8x1xf32> to vector<8x32xf32>
    %124 = arith.mulf %119, %123 : vector<8x32xf32>
    %125 = vector.broadcast %105 : vector<1x32xf32> to vector<8x32xf32>
    %126 = arith.mulf %124, %125 : vector<8x32xf32>
    %127 = vector.broadcast %106 : vector<1x32xf32> to vector<8x32xf32>
    %128 = arith.addf %126, %127 : vector<8x32xf32>
    %129 = arith.truncf %128 : vector<8x32xf32> to vector<8x32xbf16>
    %c0_78 = arith.constant 0 : index
    %c0_79 = arith.constant 0 : index
    %130 = vector.load %arg13[%c0_78, %c0_79] : memref<32x128xbf16, #tpu.memory_space<vmem>>, vector<32x128xbf16>
    %cst_80 = arith.constant dense<0.000000e+00> : vector<8x128xf32>
    %131 = tpu.matmul %129, %130, %cst_80 {dimension_numbers = #tpu.dot_dimension_numbers<[1], [0], [0], [1], [0, 0, 1, 1], [], []>} : vector<8x32xbf16>, vector<32x128xbf16>, vector<8x128xf32> -> vector<8x128xf32>
    %c0_81 = arith.constant 0 : index
    %c0_82 = arith.constant 0 : index
    %132 = vector.load %arg14[%c0_81, %c0_82] : memref<1x128xf32, #tpu.memory_space<vmem>>, vector<1x128xf32>
    %133 = vector.broadcast %132 : vector<1x128xf32> to vector<8x128xf32>
    %134 = arith.addf %131, %133 : vector<8x128xf32>
    %cst_83 = arith.constant 5.000000e-01 : f32
    %135 = vector.broadcast %cst_83 : f32 to vector<8x128xf32>
    %136 = arith.mulf %135, %134 : vector<8x128xf32>
    %cst_84 = arith.constant 4.471500e-02 : f32
    %137 = vector.broadcast %cst_84 : f32 to vector<8x128xf32>
    %138 = arith.mulf %137, %134 : vector<8x128xf32>
    %139 = arith.mulf %138, %134 : vector<8x128xf32>
    %140 = arith.mulf %139, %134 : vector<8x128xf32>
    %141 = arith.addf %134, %140 : vector<8x128xf32>
    %cst_85 = arith.constant 0.797884583 : f32
    %142 = vector.broadcast %cst_85 : f32 to vector<8x128xf32>
    %143 = arith.mulf %142, %141 : vector<8x128xf32>
    %144 = math.tanh %143 : vector<8x128xf32>
    %cst_86 = arith.constant 1.000000e+00 : f32
    %145 = vector.broadcast %cst_86 : f32 to vector<8x128xf32>
    %146 = arith.addf %145, %144 : vector<8x128xf32>
    %147 = arith.mulf %136, %146 : vector<8x128xf32>
    %148 = arith.truncf %147 : vector<8x128xf32> to vector<8x128xbf16>
    %c0_87 = arith.constant 0 : index
    %c0_88 = arith.constant 0 : index
    %149 = vector.load %arg15[%c0_87, %c0_88] : memref<128x32xbf16, #tpu.memory_space<vmem>>, vector<128x32xbf16>
    %cst_89 = arith.constant dense<0.000000e+00> : vector<8x32xf32>
    %150 = tpu.matmul %148, %149, %cst_89 {dimension_numbers = #tpu.dot_dimension_numbers<[1], [0], [0], [1], [0, 0, 1, 1], [], []>} : vector<8x128xbf16>, vector<128x32xbf16>, vector<8x32xf32> -> vector<8x32xf32>
    %c0_90 = arith.constant 0 : index
    %c0_91 = arith.constant 0 : index
    %151 = vector.load %arg16[%c0_90, %c0_91] : memref<1x32xf32, #tpu.memory_space<vmem>>, vector<1x32xf32>
    %152 = vector.broadcast %151 : vector<1x32xf32> to vector<8x32xf32>
    %153 = arith.addf %150, %152 : vector<8x32xf32>
    %154 = arith.addf %104, %153 : vector<8x32xf32>
    %c0_92 = arith.constant 0 : index
    %c0_93 = arith.constant 0 : index
    %c0_94 = arith.constant 0 : index
    %155 = vector.load %arg17[%c0_92, %c0_93, %c0_94] : memref<1x8x32xf32, #tpu.memory_space<vmem>>, vector<1x8x32xf32>
    %156 = vector.shape_cast %155 : vector<1x8x32xf32> to vector<8x32xf32>
    %157 = vector.shape_cast %154 : vector<8x32xf32> to vector<1x8x32xf32>
    tpu.vector_store %arg17[%c0_92, %c0_93, %c0_94], %157 {strides = array<i32>} : memref<1x8x32xf32, #tpu.memory_space<vmem>>, vector<1x8x32xf32>,
    return
  }
  func.func @transform_0(%arg0: i32, %arg1: i32) -> (i32, i32, i32) {
    %c0_i32 = arith.constant 0 : i32
    %c0_i32_0 = arith.constant 0 : i32
    return %arg0, %arg1, %c0_i32 : i32, i32, i32
  }
  func.func @transform_1(%arg0: i32, %arg1: i32) -> (i32, i32, i32, i32) {
    %c0_i32 = arith.constant 0 : i32
    %c0_i32_0 = arith.constant 0 : i32
    %c0_i32_1 = arith.constant 0 : i32
    %c0_i32_2 = arith.constant 0 : i32
    return %arg0, %c0_i32, %c0_i32_0, %c0_i32_1 : i32, i32, i32, i32
  }
  func.func @transform_2(%arg0: i32, %arg1: i32) -> (i32, i32, i32, i32) {
    %c0_i32 = arith.constant 0 : i32
    %c0_i32_0 = arith.constant 0 : i32
    %c0_i32_1 = arith.constant 0 : i32
    %c0_i32_2 = arith.constant 0 : i32
    return %arg0, %c0_i32, %c0_i32_0, %c0_i32_1 : i32, i32, i32, i32
  }
  func.func @transform_3(%arg0: i32, %arg1: i32) -> (i32, i32) {
    %c0_i32 = arith.constant 0 : i32
    %c0_i32_0 = arith.constant 0 : i32
    %c0_i32_1 = arith.constant 0 : i32
    return %c0_i32, %c0_i32_0 : i32, i32
  }
  func.func @transform_4(%arg0: i32, %arg1: i32) -> (i32, i32) {
    %c0_i32 = arith.constant 0 : i32
    %c0_i32_0 = arith.constant 0 : i32
    %c0_i32_1 = arith.constant 0 : i32
    return %c0_i32, %c0_i32_0 : i32, i32
  }
  func.func @transform_5(%arg0: i32, %arg1: i32) -> (i32, i32) {
    %c0_i32 = arith.constant 0 : i32
    %c0_i32_0 = arith.constant 0 : i32
    %c0_i32_1 = arith.constant 0 : i32
    return %c0_i32, %c0_i32_0 : i32, i32
  }
  func.func @transform_6(%arg0: i32, %arg1: i32) -> (i32, i32) {
    %c0_i32 = arith.constant 0 : i32
    %c0_i32_0 = arith.constant 0 : i32
    %c0_i32_1 = arith.constant 0 : i32
    return %c0_i32, %c0_i32_0 : i32, i32
  }
  func.func @transform_7(%arg0: i32, %arg1: i32) -> (i32, i32) {
    %c0_i32 = arith.constant 0 : i32
    %c0_i32_0 = arith.constant 0 : i32
    %c0_i32_1 = arith.constant 0 : i32
    return %c0_i32, %c0_i32_0 : i32, i32
  }
  func.func @transform_8(%arg0: i32, %arg1: i32) -> (i32, i32) {
    %c0_i32 = arith.constant 0 : i32
    %c0_i32_0 = arith.constant 0 : i32
    %c0_i32_1 = arith.constant 0 : i32
    return %c0_i32, %c0_i32_0 : i32, i32
  }
  func.func @transform_9(%arg0: i32, %arg1: i32) -> (i32, i32) {
    %c0_i32 = arith.constant 0 : i32
    %c0_i32_0 = arith.constant 0 : i32
    %c0_i32_1 = arith.constant 0 : i32
    return %c0_i32, %c0_i32_0 : i32, i32
  }
  func.func @transform_10(%arg0: i32, %arg1: i32) -> (i32, i32) {
    %c0_i32 = arith.constant 0 : i32
    %c0_i32_0 = arith.constant 0 : i32
    %c0_i32_1 = arith.constant 0 : i32
    return %c0_i32, %c0_i32_0 : i32, i32
  }
  func.func @transform_11(%arg0: i32, %arg1: i32) -> (i32, i32) {
    %c0_i32 = arith.constant 0 : i32
    %c0_i32_0 = arith.constant 0 : i32
    %c0_i32_1 = arith.constant 0 : i32
    return %c0_i32, %c0_i32_0 : i32, i32
  }
  func.func @transform_12(%arg0: i32, %arg1: i32) -> (i32, i32) {
    %c0_i32 = arith.constant 0 : i32
    %c0_i32_0 = arith.constant 0 : i32
    %c0_i32_1 = arith.constant 0 : i32
    return %c0_i32, %c0_i32_0 : i32, i32
  }
  func.func @transform_13(%arg0: i32, %arg1: i32) -> (i32, i32) {
    %c0_i32 = arith.constant 0 : i32
    %c0_i32_0 = arith.constant 0 : i32
    %c0_i32_1 = arith.constant 0 : i32
    return %c0_i32, %c0_i32_0 : i32, i32
  }
  func.func @transform_14(%arg0: i32, %arg1: i32) -> (i32, i32) {
    %c0_i32 = arith.constant 0 : i32
    %c0_i32_0 = arith.constant 0 : i32
    %c0_i32_1 = arith.constant 0 : i32
    return %c0_i32, %c0_i32_0 : i32, i32
  }
  func.func @transform_15(%arg0: i32, %arg1: i32) -> (i32, i32, i32) {
    %c0_i32 = arith.constant 0 : i32
    %c0_i32_0 = arith.constant 0 : i32
    return %arg0, %arg1, %c0_i32 : i32, i32, i32
  }
}

</mosaic_0001>

<llo_original>
// kernel: gpt_forward.5
$region0: #{gpt_forward.5}
  #allocation0 [shape = 'u32[]', space=smem, size = 0x4, offset = 0x4, fixed_abs, tag = 'smem constant byte address 0x4 - core index']
  #allocation1 [shape = 'u32[72,128]{1,0:T(1,128)}', space=vmem, size = 0x9000, scoped, tag = 'internal scratch']
  %s0 = inlined_call_operand.vmem [shape: f32[2,8,32], index: 0, kind: input, shape index: {}]
  %s1 = inlined_call_operand.vmem [shape: f32[1,32], index: 1, kind: input, shape index: {}]
  %s2 = inlined_call_operand.vmem [shape: f32[1,32], index: 2, kind: input, shape index: {}]
  %s3 = inlined_call_operand.vmem [shape: bf16[32,64], index: 3, kind: input, shape index: {}]
  %s4 = inlined_call_operand.vmem [shape: f32[1,64], index: 4, kind: input, shape index: {}]
  %s5 = inlined_call_operand.vmem [shape: bf16[2,2,8,16], index: 5, kind: output, shape index: {0}]
  %s6 = inlined_call_operand.vmem [shape: bf16[2,2,8,16], index: 6, kind: output, shape index: {1}]
  %7 = xla_tuple %s5, %s6
  %s8 = sld [smem:[#allocation0]]
  $region61: #{gpt_forward.5} parent=0
    _
  %s10 = ssub.s32 1, %s8
  %s11 = scalar_select 0, %s10, %s8
  loop: start=0, step=1, limit=4
  $region2: #{gpt_forward.5} parent=0 // loop_pre_header
    _
  $region3: #{gpt_forward.5} parent=0 // loop_header
    %s13 = sphi 0, %s17
    %p14 = scmp.ge.s32.totalorder %s13, 4
    %s20 = sphi 0, %s32
    %s21 = sphi 0, %s28
    %s22 = sphi 0, %s20
    %s23 = sphi 0, %s21
    %s24 = sphi 0, %s22
    %s25 = sphi 0, %s23
    %s37 = sphi 0, %s39
    %s40 = sphi 0, %s37
    %s41 = sphi 0, %s40
    %s57 = sphi 0, %s41
    %s61 = sphi 0, %s61
    %s63 = sphi 0, %s61
    %s64 = sphi 0, %s63
    %s78 = sphi 0, %s64
    %s82 = sphi 0, %s82
    %s84 = sphi 0, %s82
    %s85 = sphi 0, %s84
    %s99 = sphi 0, %s85
    %s103 = sphi 0, %s103
    %s105 = sphi 0, %s103
    %s106 = sphi 0, %s105
    %s120 = sphi 0, %s106
    %s124 = sphi 0, %s124
    %s126 = sphi 0, %s124
    %s127 = sphi 0, %s126
    %s141 = sphi 0, %s127
    %s149 = sphi 0, %s151
    %s152 = sphi 0, %s149
    %s153 = sphi 0, %s152
    %s169 = sphi 0, %s153
    %s177 = sphi 0, %s179
    %s180 = sphi 0, %s177
    %s181 = sphi 0, %s180
    %s197 = sphi 0, %s181
  $region4: #{gpt_forward.5} parent=0 // loop_header_branch
    %16 = sbr.rel (%p14) target = $region8
  $region5: #{gpt_forward.5} parent=0 // loop_body
    %s18 = ssub.s32 %s13, 1
    %s19 = ssub.s32 %s13, 2
    %s26 = sadd.s32 1, %s21
    %p27 = scmp.ge.s32.totalorder %s26, 1
    %s28 = scalar_select %p27, 0, %s26
    %s29 = sadd.s32 1, %s20
    %s30 = scalar_select %p27, %s29, %s20
    %p31 = scmp.ge.s32.totalorder %s30, 2
    %s32 = scalar_select %p31, 0, %s30
    %s33 = ssub.s32 %s20, %s32
    %s34 = ssub.s32 %s21, %s28
    %s35 = sor.u32 %s33, %s34
    %p36 = scmp.eq.s32.totalorder %s35, 0
    %s38 = sadd.s32 %s37, 1
    %s39 = scalar_select %p36, %s37, %s38
    %p42 = pneg %p36
    %p43 = scmp.eq.s32.totalorder %s13, 1
    %p44 = por %p42, %p43
    %p45 = scmp.ne.s32.totalorder %s37, %s40
    %p46 = scmp.eq.s32.totalorder %s13, 0
    %p47 = por %p45, %p46
    %p48 = scmp.ne.s32.totalorder %s37, %s40
    %p49 = scmp.eq.s32.totalorder %s18, 1
    %p50 = por %p48, %p49
    %p51 = scmp.ne.s32.totalorder %s40, %s41
    %p52 = scmp.eq.s32.totalorder %s18, 0
    %p53 = por %p51, %p52
    %p54 = scmp.ne.s32.totalorder %s40, %s41
    %p55 = scmp.eq.s32.totalorder %s19, 1
    %p56 = por %p54, %p55
    %p58 = scmp.ne.s32.totalorder %s41, %s57
    %p59 = scmp.eq.s32.totalorder %s19, 0
    %p60 = por %p58, %p59
    %s62 = sadd.s32 %s61, 1
    %p65 = scmp.eq.s32.totalorder %s13, 1
    %p66 = scmp.ne.s32.totalorder %s61, %s63
    %p67 = scmp.eq.s32.totalorder %s13, 0
    %p68 = por %p66, %p67
    %p69 = scmp.ne.s32.totalorder %s61, %s63
    %p70 = scmp.eq.s32.totalorder %s18, 1
    %p71 = por %p69, %p70
    %p72 = scmp.ne.s32.totalorder %s63, %s64
    %p73 = scmp.eq.s32.totalorder %s18, 0
    %p74 = por %p72, %p73
    %p75 = scmp.ne.s32.totalorder %s63, %s64
    %p76 = scmp.eq.s32.totalorder %s19, 1
    %p77 = por %p75, %p76
    %p79 = scmp.ne.s32.totalorder %s64, %s78
    %p80 = scmp.eq.s32.totalorder %s19, 0
    %p81 = por %p79, %p80
    %s83 = sadd.s32 %s82, 1
    %p86 = scmp.eq.s32.totalorder %s13, 1
    %p87 = scmp.ne.s32.totalorder %s82, %s84
    %p88 = scmp.eq.s32.totalorder %s13, 0
    %p89 = por %p87, %p88
    %p90 = scmp.ne.s32.totalorder %s82, %s84
    %p91 = scmp.eq.s32.totalorder %s18, 1
    %p92 = por %p90, %p91
    %p93 = scmp.ne.s32.totalorder %s84, %s85
    %p94 = scmp.eq.s32.totalorder %s18, 0
    %p95 = por %p93, %p94
    %p96 = scmp.ne.s32.totalorder %s84, %s85
    %p97 = scmp.eq.s32.totalorder %s19, 1
    %p98 = por %p96, %p97
    %p100 = scmp.ne.s32.totalorder %s85, %s99
    %p101 = scmp.eq.s32.totalorder %s19, 0
    %p102 = por %p100, %p101
    %s104 = sadd.s32 %s103, 1
    %p107 = scmp.eq.s32.totalorder %s13, 1
    %p108 = scmp.ne.s32.totalorder %s103, %s105
    %p109 = scmp.eq.s32.totalorder %s13, 0
    %p110 = por %p108, %p109
    %p111 = scmp.ne.s32.totalorder %s103, %s105
    %p112 = scmp.eq.s32.totalorder %s18, 1
    %p113 = por %p111, %p112
    %p114 = scmp.ne.s32.totalorder %s105, %s106
    %p115 = scmp.eq.s32.totalorder %s18, 0
    %p116 = por %p114, %p115
    %p117 = scmp.ne.s32.totalorder %s105, %s106
    %p118 = scmp.eq.s32.totalorder %s19, 1
    %p119 = por %p117, %p118
    %p121 = scmp.ne.s32.totalorder %s106, %s120
    %p122 = scmp.eq.s32.totalorder %s19, 0
    %p123 = por %p121, %p122
    %s125 = sadd.s32 %s124, 1
    %p128 = scmp.eq.s32.totalorder %s13, 1
    %p129 = scmp.ne.s32.totalorder %s124, %s126
    %p130 = scmp.eq.s32.totalorder %s13, 0
    %p131 = por %p129, %p130
    %p132 = scmp.ne.s32.totalorder %s124, %s126
    %p133 = scmp.eq.s32.totalorder %s18, 1
    %p134 = por %p132, %p133
    %p135 = scmp.ne.s32.totalorder %s126, %s127
    %p136 = scmp.eq.s32.totalorder %s18, 0
    %p137 = por %p135, %p136
    %p138 = scmp.ne.s32.totalorder %s126, %s127
    %p139 = scmp.eq.s32.totalorder %s19, 1
    %p140 = por %p138, %p139
    %p142 = scmp.ne.s32.totalorder %s127, %s141
    %p143 = scmp.eq.s32.totalorder %s19, 0
    %p144 = por %p142, %p143
    %s145 = ssub.s32 %s20, %s32
    %s146 = ssub.s32 %s21, %s28
    %s147 = sor.u32 %s145, %s146
    %p148 = scmp.eq.s32.totalorder %s147, 0
    %s150 = sadd.s32 %s149, 1
    %s151 = scalar_select %p148, %s149, %s150
    %p154 = pneg %p148
    %p155 = scmp.eq.s32.totalorder %s13, 1
    %p156 = por %p154, %p155
    %p157 = scmp.ne.s32.totalorder %s149, %s152
    %p158 = scmp.eq.s32.totalorder %s13, 0
    %p159 = por %p157, %p158
    %p160 = scmp.ne.s32.totalorder %s149, %s152
    %p161 = scmp.eq.s32.totalorder %s18, 1
    %p162 = por %p160, %p161
    %p163 = scmp.ne.s32.totalorder %s152, %s153
    %p164 = scmp.eq.s32.totalorder %s18, 0
    %p165 = por %p163, %p164
    %p166 = scmp.ne.s32.totalorder %s152, %s153
    %p167 = scmp.eq.s32.totalorder %s19, 1
    %p168 = por %p166, %p167
    %p170 = scmp.ne.s32.totalorder %s153, %s169
    %p171 = scmp.eq.s32.totalorder %s19, 0
    %p172 = por %p170, %p171
    %s173 = ssub.s32 %s20, %s32
    %s174 = ssub.s32 %s21, %s28
    %s175 = sor.u32 %s173, %s174
    %p176 = scmp.eq.s32.totalorder %s175, 0
    %s178 = sadd.s32 %s177, 1
    %s179 = scalar_select %p176, %s177, %s178
    %p182 = pneg %p176
    %p183 = scmp.eq.s32.totalorder %s13, 1
    %p184 = por %p182, %p183
    %p185 = scmp.ne.s32.totalorder %s177, %s180
    %p186 = scmp.eq.s32.totalorder %s13, 0
    %p187 = por %p185, %p186
    %p188 = scmp.ne.s32.totalorder %s177, %s180
    %p189 = scmp.eq.s32.totalorder %s18, 1
    %p190 = por %p188, %p189
    %p191 = scmp.ne.s32.totalorder %s180, %s181
    %p192 = scmp.eq.s32.totalorder %s18, 0
    %p193 = por %p191, %p192
    %p194 = scmp.ne.s32.totalorder %s180, %s181
    %p195 = scmp.eq.s32.totalorder %s19, 1
    %p196 = por %p194, %p195
    %p198 = scmp.ne.s32.totalorder %s181, %s197
    %p199 = scmp.eq.s32.totalorder %s19, 0
    %p200 = por %p198, %p199
    %p201 = scmp.le.s32.totalorder 1, %s13
    %p202 = scmp.lt.s32.totalorder %s13, 3
    %p203 = pnand %p201, %p202
    %p204 = pneg %p203
    // Predicated region
    $region9: #{gpt_forward.5} parent=5 // pred_check
      _
    $region10: #{gpt_forward.5} parent=5 // pred_check_branch
      %206 = sbr.rel (%p203) target = $region12
    $region11: #{gpt_forward.5} parent=5 // pred_region
      %s207 = ssub.s32 %s13, 1
      // Predicated region
      $region13: #{gpt_forward.5} parent=11 // pred_check
        %p208 = pneg %p74
      $region14: #{gpt_forward.5} parent=11 // pred_check_branch
        %210 = sbr.rel (%p208) target = $region16
      $region15: #{gpt_forward.5} parent=11 // pred_region
        _
      $region16: #{gpt_forward.5} parent=11 // pred_fallthru
        _
      // Predicated region
      $region17: #{gpt_forward.5} parent=11 // pred_check
        %p211 = pneg %p95
      $region18: #{gpt_forward.5} parent=11 // pred_check_branch
        %213 = sbr.rel (%p211) target = $region20
      $region19: #{gpt_forward.5} parent=11 // pred_region
        _
      $region20: #{gpt_forward.5} parent=11 // pred_fallthru
        _
      // Predicated region
      $region21: #{gpt_forward.5} parent=11 // pred_check
        %p214 = pneg %p116
      $region22: #{gpt_forward.5} parent=11 // pred_check_branch
        %216 = sbr.rel (%p214) target = $region24
      $region23: #{gpt_forward.5} parent=11 // pred_region
        _
      $region24: #{gpt_forward.5} parent=11 // pred_fallthru
        _
      // Predicated region
      $region25: #{gpt_forward.5} parent=11 // pred_check
        %p217 = pneg %p137
      $region26: #{gpt_forward.5} parent=11 // pred_check_branch
        %219 = sbr.rel (%p217) target = $region28
      $region27: #{gpt_forward.5} parent=11 // pred_region
        _
      $region28: #{gpt_forward.5} parent=11 // pred_fallthru
        _
    $region12: #{gpt_forward.5} parent=5 // pred_fallthru
      _
    %p220 = scmp.lt.s32.totalorder %s13, 2
    // Predicated region
    $region29: #{gpt_forward.5} parent=5 // pred_check
      %p221 = pneg %p220
    $region30: #{gpt_forward.5} parent=5 // pred_check_branch
      %223 = sbr.rel (%p221) target = $region32
    $region31: #{gpt_forward.5} parent=5 // pred_region
      // Predicated region
      $region33: #{gpt_forward.5} parent=31 // pred_check
        %p224 = pneg %p47
      $region34: #{gpt_forward.5} parent=31 // pred_check_branch
        %226 = sbr.rel (%p224) target = $region36
      $region35: #{gpt_forward.5} parent=31 // pred_region
        %p227 = scmp.lt.s32.totalorder %s20, 1
        %s228 = scalar_select %p227, %s20, 1
        %p229 = scmp.lt.s32.totalorder %s21, 0
        %s230 = scalar_select %p229, %s21, 0
        %s231 = sadd.s32 %s230, %s228
        %s232 = smul.addr %s231, 8
        %s233 = scalar_lea.vmem %s0, %s232
      $region36: #{gpt_forward.5} parent=31 // pred_fallthru
        _
    $region32: #{gpt_forward.5} parent=5 // pred_fallthru
      _
    %p234 = scmp.le.s32.totalorder 1, %s13
    %p235 = scmp.lt.s32.totalorder %s13, 3
    %p236 = pnand %p234, %p235
    %p237 = pneg %p236
    // Predicated region
    $region37: #{gpt_forward.5} parent=5 // pred_check
      _
    $region38: #{gpt_forward.5} parent=5 // pred_check_branch
      %239 = sbr.rel (%p236) target = $region40
    $region39: #{gpt_forward.5} parent=5 // pred_region
      %s240 = ssub.s32 %s13, 1
      %p241 = scmp.lt.s32.totalorder %s22, 1
      %s242 = scalar_select %p241, %s22, 1
      %p243 = scmp.lt.s32.totalorder %s23, 0
      %s244 = scalar_select %p243, %s23, 0
      %s245 = sadd.s32 %s244, %s242
      %s246 = smul.addr %s245, 8
      %s247 = scalar_lea.vmem %s0, %s246
      %p248 = pneg %p53
      %p249 = pneg %p50
      %p250 = pneg %p74
      %p251 = pneg %p71
      %p252 = pneg %p95
      %p253 = pneg %p92
      %p254 = pneg %p116
      %p255 = pneg %p113
      %p256 = pneg %p137
      %p257 = pneg %p134
      %p258 = pneg %p165
      %p259 = pneg %p162
      %p260 = scmp.lt.s32.totalorder %s22, 1
      %s261 = scalar_select %p260, %s22, 1
      %p262 = scmp.lt.s32.totalorder %s23, 0
      %s263 = scalar_select %p262, %s23, 0
      %s264 = smul.addr %s261, 2
      %s265 = sadd.s32 %s263, %s264
      %s266 = smul.addr %s265, 4
      %s267 = scalar_lea.vmem %s5, %s266
      %p268 = pneg %p193
      %p269 = pneg %p190
      %p270 = scmp.lt.s32.totalorder %s22, 1
      %s271 = scalar_select %p270, %s22, 1
      %p272 = scmp.lt.s32.totalorder %s23, 0
      %s273 = scalar_select %p272, %s23, 0
      %s274 = smul.addr %s271, 2
      %s275 = sadd.s32 %s273, %s274
      %s276 = smul.addr %s275, 4
      %s277 = scalar_lea.vmem %s6, %s276
      %p278 = scmp.lt.s32.totalorder %s22, 1
      %s279 = scalar_select %p278, %s22, 1
      %p280 = scmp.lt.s32.totalorder %s23, 0
      %s281 = scalar_select %p280, %s23, 0
      %s282 = sadd.s32 %s281, %s279
      %s283 = smul.addr %s282, 8
      %s284 = scalar_lea.vmem %s0, %s283
      %p285 = scmp.lt.s32.totalorder %s22, 1
      %s286 = scalar_select %p285, %s22, 1
      %p287 = scmp.lt.s32.totalorder %s23, 0
      %s288 = scalar_select %p287, %s23, 0
      %s289 = smul.addr %s286, 2
      %s290 = sadd.s32 %s288, %s289
      %s291 = smul.addr %s290, 4
      %s292 = scalar_lea.vmem %s5, %s291
      %p293 = scmp.lt.s32.totalorder %s22, 1
      %s294 = scalar_select %p293, %s22, 1
      %p295 = scmp.lt.s32.totalorder %s23, 0
      %s296 = scalar_select %p295, %s23, 0
      %s297 = smul.addr %s294, 2
      %s298 = sadd.s32 %s296, %s297
      %s299 = smul.addr %s298, 4
      %s300 = scalar_lea.vmem %s6, %s299
      %v302 = vld [vmem:[%s284] sm:$0xff]
      %v303 = vld [vmem:[%s1] sm:$0x1]
      %v304 = vld [vmem:[%s2] sm:$0x1]
      %vm305 = vcmask 261120
      %v306 = vsel %vm305, %v302, 0.0
      %307 = vadd.xlane.f32.xlu0 %v306
      %v308 = vpop.xlane.xlu0 %307
      %v309 = vrcp.pop 32.0
      %v310 = vmul.f32 32.0, %v309
      %v311 = vsub.f32 1.0, %v310
      %v312 = vmul.f32 %v309, %v311
      %v313 = vadd.f32 %v309, %v312
      %vm314 = vweird.f32 %v309
      %v315 = vsel %vm314, %v309, %v313
      %v316 = vmul.f32 %v308, %v315
      %v317 = vsub.f32 %v302, %v316
      %v318 = vmul.f32 %v317, %v317
      %v319 = vsel %vm305, %v318, 0.0
      %320 = vadd.xlane.f32.xlu0 %v319
      %v321 = vpop.xlane.xlu0 %320
      %v322 = vmul.f32 %v321, %v315
      %v323 = vadd.f32 %v322, 1e-05
      %v324 = vrsqrt.pop %v323
      %v325 = vmul.f32 %v324, %v323
      %v326 = vmul.f32 %v325, %v324
      %v327 = vmul.f32 0.5, %v326
      %v328 = vsub.f32 1.5, %v327
      %v329 = vmul.f32 %v324, %v328
      %vm330 = vweird.f32 %v323
      %vm331 = vweird.f32 %v324
      %vm332 = vmor %vm330, %vm331
      %v333 = vsel %vm332, %v324, %v329
      %v334 = vmul.f32 %v317, %v333
      %v336 = vperm.slane %v303, 0
      %v338 = vmul.f32 %v334, %v336
      %v340 = vperm.slane %v304, 0
      %v342 = vadd.f32 %v338, %v340
      %v343 = vpack.c.bf16 %v342, %v342
      %v344 = vld [vmem:[%s3] sm:$0xf]
      %v345 = vld [vmem:[%s3 + $0x4] sm:$0xf]
      %v346 = vld [vmem:[%s3 + $0x8] sm:$0xf]
      %v347 = vld [vmem:[%s3 + $0xc] sm:$0xf]
      %v348 = vld [vmem:[%s4] sm:$0x1]
      %v350 = vperm.slane %v348, 0
      %v356 = vunpack.c.l.b16 %v344
      %v357 = vunpack.c.l.b16 %v345
      %v358 = vunpack.c.l.b16 %v346
      %v359 = vunpack.c.l.b16 %v347
      %v360 = vpack.c.b16 %v357, %v356
      %v361 = vpack.c.b16 %v359, %v358
      %v365 = vsel %vm305, %v343, 0
      %367 = vmatpush.bf16.msra.mxu0 0
      %368 = vmatpush.bf16.msra.mxu0 0
      %369 = vmatpush.bf16.msra.mxu0 0
      %370 = vmatpush.bf16.msra.mxu0 0
      %371 = vmatpush.bf16.msra.mxu0 0
      %372 = vmatpush.bf16.msra.mxu0 0
      %373 = vmatpush.bf16.msra.mxu0 %v361
      %374 = vmatpush.bf16.msra.mxu0 %v360
      %375 = vmatmul.bf16.gmra.mxu0 %v365
      %v376 = vpop.f32.mrf.mxu0
      %v377 = vadd.f32 %v350, %v376
      %v378 = vpop.f32.mrf.mxu0
      %379 = vdwg.mxu0
      %381 = vrot.lane.b32.xlu0 %v377, 112
      %v382 = vpop.permute.xlu0 %381
      %v384 = vpack.c.bf16 %v377, %v377
      %v385 = vpack.c.bf16 %v382, %v382
      %vm386 = vcmask 125952
      %387 = vst.msk [vmem:[%s292] sm:$0xf] %vm386, %v384
      %388 = vst.msk [vmem:[%s292 + $0x4] sm:$0xf] %vm386, %v385
      %391 = vrot.lane.b32.xlu0 %v384, 96
      %v392 = vpop.permute.xlu0 %391
      %393 = vrot.lane.b32.xlu0 %v385, 96
      %v394 = vpop.permute.xlu0 %393
      %397 = vst.msk [vmem:[%s300] sm:$0xf] %vm386, %v392
      %398 = vst.msk [vmem:[%s300 + $0x4] sm:$0xf] %vm386, %v394
      %p399 = scmp.lt.s32.totalorder %s22, 1
      %s400 = scalar_select %p399, %s22, 1
      %p401 = scmp.lt.s32.totalorder %s23, 0
      %s402 = scalar_select %p401, %s23, 0
      %s403 = smul.addr %s400, 2
      %s404 = sadd.s32 %s402, %s403
      %s405 = smul.addr %s404, 4
      %s406 = scalar_lea.vmem %s5, %s405
      %p407 = scmp.lt.s32.totalorder %s22, 1
      %s408 = scalar_select %p407, %s22, 1
      %p409 = scmp.lt.s32.totalorder %s23, 0
      %s410 = scalar_select %p409, %s23, 0
      %s411 = smul.addr %s408, 2
      %s412 = sadd.s32 %s410, %s411
      %s413 = smul.addr %s412, 4
      %s414 = scalar_lea.vmem %s6, %s413
      // Predicated region
      $region41: #{gpt_forward.5} parent=39 // pred_check
        %p415 = pneg %p162
      $region42: #{gpt_forward.5} parent=39 // pred_check_branch
        %417 = sbr.rel (%p415) target = $region44
      $region43: #{gpt_forward.5} parent=39 // pred_region
        _
      $region44: #{gpt_forward.5} parent=39 // pred_fallthru
        _
      // Predicated region
      $region45: #{gpt_forward.5} parent=39 // pred_check
        %p418 = pneg %p190
      $region46: #{gpt_forward.5} parent=39 // pred_check_branch
        %420 = sbr.rel (%p418) target = $region48
      $region47: #{gpt_forward.5} parent=39 // pred_region
        _
      $region48: #{gpt_forward.5} parent=39 // pred_fallthru
        _
    $region40: #{gpt_forward.5} parent=5 // pred_fallthru
      _
    %p421 = scmp.le.s32.totalorder 2, %s13
    // Predicated region
    $region49: #{gpt_forward.5} parent=5 // pred_check
      %p422 = pneg %p421
    $region50: #{gpt_forward.5} parent=5 // pred_check_branch
      %424 = sbr.rel (%p422) target = $region52
    $region51: #{gpt_forward.5} parent=5 // pred_region
      %s425 = ssub.s32 %s13, 2
      // Predicated region
      $region53: #{gpt_forward.5} parent=51 // pred_check
        %p426 = pneg %p168
      $region54: #{gpt_forward.5} parent=51 // pred_check_branch
        %428 = sbr.rel (%p426) target = $region56
      $region55: #{gpt_forward.5} parent=51 // pred_region
        %p429 = scmp.lt.s32.totalorder %s24, 1
        %s430 = scalar_select %p429, %s24, 1
        %p431 = scmp.lt.s32.totalorder %s25, 0
        %s432 = scalar_select %p431, %s25, 0
        %s433 = smul.addr %s430, 2
        %s434 = sadd.s32 %s432, %s433
        %s435 = smul.addr %s434, 4
        %s436 = scalar_lea.vmem %s5, %s435
      $region56: #{gpt_forward.5} parent=51 // pred_fallthru
        _
      // Predicated region
      $region57: #{gpt_forward.5} parent=51 // pred_check
        %p437 = pneg %p196
      $region58: #{gpt_forward.5} parent=51 // pred_check_branch
        %439 = sbr.rel (%p437) target = $region60
      $region59: #{gpt_forward.5} parent=51 // pred_region
        %p440 = scmp.lt.s32.totalorder %s24, 1
        %s441 = scalar_select %p440, %s24, 1
        %p442 = scmp.lt.s32.totalorder %s25, 0
        %s443 = scalar_select %p442, %s25, 0
        %s444 = smul.addr %s441, 2
        %s445 = sadd.s32 %s443, %s444
        %s446 = smul.addr %s445, 4
        %s447 = scalar_lea.vmem %s6, %s446
      $region60: #{gpt_forward.5} parent=51 // pred_fallthru
        _
    $region52: #{gpt_forward.5} parent=5 // pred_fallthru
      _
  $region6: #{gpt_forward.5} parent=0 // loop_footer
    %s17 = sadd.s32 1, %s13
  $region7: #{gpt_forward.5} parent=0 // loop_footer_branch
    %12 = sbr.rel target = $region3
  $region8: #{gpt_forward.5} parent=0 // loop_exit
    _

// kernel: gpt_forward.9
$region0: #{gpt_forward.9}
  #allocation0 [shape = 'u32[]', space=smem, size = 0x4, offset = 0x4, fixed_abs, tag = 'smem constant byte address 0x4 - core index']
  #allocation1 [shape = 'u32[72,128]{1,0:T(1,128)}', space=vmem, size = 0x9000, scoped, tag = 'internal scratch']
  #allocation2 [shape = 'bf16[8,32]{1,0:T(8,128)(2,1)}', space=vmem, size = 0x800, scoped, tag = 'scratch operand']
  %s0 = inlined_call_operand.vmem [shape: f32[2,8,32], index: 0, kind: input, shape index: {}]
  %s1 = inlined_call_operand.vmem [shape: f32[1,32], index: 1, kind: input, shape index: {}]
  %s2 = inlined_call_operand.vmem [shape: f32[1,32], index: 2, kind: input, shape index: {}]
  %s3 = inlined_call_operand.vmem [shape: bf16[128,32], index: 3, kind: input, shape index: {}]
  %s4 = inlined_call_operand.hbm [shape: f32[2,8,128], index: 4, kind: output, shape index: {}]
  %s5 = sld [smem:[#allocation0]]
  $region53: #{gpt_forward.9} parent=0
    _
  %s7 = ssub.s32 1, %s5
  %s8 = scalar_select 0, %s7, %s5
  $region1: #{gpt_forward.9} parent=0
    #allocation3 [shape = 'u8[8192]{0}', space=vmem, size = 0x2000, scoped, tag = 'output window, operand 0']
    #allocation4 [shape = 's32[2]{0}', space=sflag, size = 0x8, scoped, tag = 'scoped memory for gpt_forward.9']
    %9 = vsyncpa [#allocation4], 0
    %s10 = scalar_lea.sflag [#allocation4], 1
    %11 = vsyncpa %s10, 0
    loop: start=0, step=1, limit=4
    $region2: #{gpt_forward.9} parent=1 // loop_pre_header
      _
    $region3: #{gpt_forward.9} parent=1 // loop_header
      %s13 = sphi 0, %s17
      %p14 = scmp.ge.s32.totalorder %s13, 4
      %s20 = sphi 0, %s32
      %s21 = sphi 0, %s28
      %s22 = sphi 0, %s20
      %s23 = sphi 0, %s21
      %s24 = sphi 0, %s22
      %s25 = sphi 0, %s23
      %s35 = sphi 0, %s37
      %s38 = sphi 0, %s35
      %s39 = sphi 0, %s38
      %s55 = sphi 0, %s39
      %s59 = sphi 0, %s59
      %s61 = sphi 0, %s59
      %s62 = sphi 0, %s61
      %s76 = sphi 0, %s62
      %s80 = sphi 0, %s80
      %s82 = sphi 0, %s80
      %s83 = sphi 0, %s82
      %s97 = sphi 0, %s83
      %s103 = sphi 0, %s105
      %s106 = sphi 0, %s103
      %s107 = sphi 0, %s106
      %s123 = sphi 0, %s107
      %s131 = sphi 0, %s133
      %s134 = sphi 0, %s131
      %s135 = sphi 0, %s134
      %s151 = sphi 0, %s135
    $region4: #{gpt_forward.9} parent=1 // loop_header_branch
      %16 = sbr.rel (%p14) target = $region8
    $region5: #{gpt_forward.9} parent=1 // loop_body
      %s18 = ssub.s32 %s13, 1
      %s19 = ssub.s32 %s13, 2
      %s26 = sadd.s32 1, %s21
      %p27 = scmp.ge.s32.totalorder %s26, 1
      %s28 = scalar_select %p27, 0, %s26
      %s29 = sadd.s32 1, %s20
      %s30 = scalar_select %p27, %s29, %s20
      %p31 = scmp.ge.s32.totalorder %s30, 2
      %s32 = scalar_select %p31, 0, %s30
      %s33 = ssub.s32 %s20, %s32
      %p34 = scmp.eq.s32.totalorder %s33, 0
      %s36 = sadd.s32 %s35, 1
      %s37 = scalar_select %p34, %s35, %s36
      %p40 = pneg %p34
      %p41 = scmp.eq.s32.totalorder %s13, 1
      %p42 = por %p40, %p41
      %p43 = scmp.ne.s32.totalorder %s35, %s38
      %p44 = scmp.eq.s32.totalorder %s13, 0
      %p45 = por %p43, %p44
      %p46 = scmp.ne.s32.totalorder %s35, %s38
      %p47 = scmp.eq.s32.totalorder %s18, 1
      %p48 = por %p46, %p47
      %p49 = scmp.ne.s32.totalorder %s38, %s39
      %p50 = scmp.eq.s32.totalorder %s18, 0
      %p51 = por %p49, %p50
      %p52 = scmp.ne.s32.totalorder %s38, %s39
      %p53 = scmp.eq.s32.totalorder %s19, 1
      %p54 = por %p52, %p53
      %p56 = scmp.ne.s32.totalorder %s39, %s55
      %p57 = scmp.eq.s32.totalorder %s19, 0
      %p58 = por %p56, %p57
      %s60 = sadd.s32 %s59, 1
      %p63 = scmp.eq.s32.totalorder %s13, 1
      %p64 = scmp.ne.s32.totalorder %s59, %s61
      %p65 = scmp.eq.s32.totalorder %s13, 0
      %p66 = por %p64, %p65
      %p67 = scmp.ne.s32.totalorder %s59, %s61
      %p68 = scmp.eq.s32.totalorder %s18, 1
      %p69 = por %p67, %p68
      %p70 = scmp.ne.s32.totalorder %s61, %s62
      %p71 = scmp.eq.s32.totalorder %s18, 0
      %p72 = por %p70, %p71
      %p73 = scmp.ne.s32.totalorder %s61, %s62
      %p74 = scmp.eq.s32.totalorder %s19, 1
      %p75 = por %p73, %p74
      %p77 = scmp.ne.s32.totalorder %s62, %s76
      %p78 = scmp.eq.s32.totalorder %s19, 0
      %p79 = por %p77, %p78
      %s81 = sadd.s32 %s80, 1
      %p84 = scmp.eq.s32.totalorder %s13, 1
      %p85 = scmp.ne.s32.totalorder %s80, %s82
      %p86 = scmp.eq.s32.totalorder %s13, 0
      %p87 = por %p85, %p86
      %p88 = scmp.ne.s32.totalorder %s80, %s82
      %p89 = scmp.eq.s32.totalorder %s18, 1
      %p90 = por %p88, %p89
      %p91 = scmp.ne.s32.totalorder %s82, %s83
      %p92 = scmp.eq.s32.totalorder %s18, 0
      %p93 = por %p91, %p92
      %p94 = scmp.ne.s32.totalorder %s82, %s83
      %p95 = scmp.eq.s32.totalorder %s19, 1
      %p96 = por %p94, %p95
      %p98 = scmp.ne.s32.totalorder %s83, %s97
      %p99 = scmp.eq.s32.totalorder %s19, 0
      %p100 = por %p98, %p99
      %s101 = ssub.s32 %s21, %s28
      %p102 = scmp.eq.s32.totalorder %s101, 0
      %s104 = sadd.s32 %s103, 1
      %s105 = scalar_select %p102, %s103, %s104
      %p108 = pneg %p102
      %p109 = scmp.eq.s32.totalorder %s13, 1
      %p110 = por %p108, %p109
      %p111 = scmp.ne.s32.totalorder %s103, %s106
      %p112 = scmp.eq.s32.totalorder %s13, 0
      %p113 = por %p111, %p112
      %p114 = scmp.ne.s32.totalorder %s103, %s106
      %p115 = scmp.eq.s32.totalorder %s18, 1
      %p116 = por %p114, %p115
      %p117 = scmp.ne.s32.totalorder %s106, %s107
      %p118 = scmp.eq.s32.totalorder %s18, 0
      %p119 = por %p117, %p118
      %p120 = scmp.ne.s32.totalorder %s106, %s107
      %p121 = scmp.eq.s32.totalorder %s19, 1
      %p122 = por %p120, %p121
      %p124 = scmp.ne.s32.totalorder %s107, %s123
      %p125 = scmp.eq.s32.totalorder %s19, 0
      %p126 = por %p124, %p125
      %s127 = ssub.s32 %s20, %s32
      %s128 = ssub.s32 %s21, %s28
      %s129 = sor.u32 %s127, %s128
      %p130 = scmp.eq.s32.totalorder %s129, 0
      %s132 = sadd.s32 %s131, 1
      %s133 = scalar_select %p130, %s131, %s132
      %p136 = pneg %p130
      %p137 = scmp.eq.s32.totalorder %s13, 1
      %p138 = por %p136, %p137
      %p139 = scmp.ne.s32.totalorder %s131, %s134
      %p140 = scmp.eq.s32.totalorder %s13, 0
      %p141 = por %p139, %p140
      %p142 = scmp.ne.s32.totalorder %s131, %s134
      %p143 = scmp.eq.s32.totalorder %s18, 1
      %p144 = por %p142, %p143
      %p145 = scmp.ne.s32.totalorder %s134, %s135
      %p146 = scmp.eq.s32.totalorder %s18, 0
      %p147 = por %p145, %p146
      %p148 = scmp.ne.s32.totalorder %s134, %s135
      %p149 = scmp.eq.s32.totalorder %s19, 1
      %p150 = por %p148, %p149
      %p152 = scmp.ne.s32.totalorder %s135, %s151
      %p153 = scmp.eq.s32.totalorder %s19, 0
      %p154 = por %p152, %p153
      %p155 = scmp.le.s32.totalorder 1, %s13
      %p156 = scmp.lt.s32.totalorder %s13, 3
      %p157 = pnand %p155, %p156
      %p158 = pneg %p157
      // Predicated region
      $region9: #{gpt_forward.9} parent=5 // pred_check
        _
      $region10: #{gpt_forward.9} parent=5 // pred_check_branch
        %160 = sbr.rel (%p157) target = $region12
      $region11: #{gpt_forward.9} parent=5 // pred_region
        %s161 = ssub.s32 %s13, 1
        // Predicated region
        $region13: #{gpt_forward.9} parent=11 // pred_check
          %p162 = pneg %p72
        $region14: #{gpt_forward.9} parent=11 // pred_check_branch
          %164 = sbr.rel (%p162) target = $region16
        $region15: #{gpt_forward.9} parent=11 // pred_region
          _
        $region16: #{gpt_forward.9} parent=11 // pred_fallthru
          _
        // Predicated region
        $region17: #{gpt_forward.9} parent=11 // pred_check
          %p165 = pneg %p93
        $region18: #{gpt_forward.9} parent=11 // pred_check_branch
          %167 = sbr.rel (%p165) target = $region20
        $region19: #{gpt_forward.9} parent=11 // pred_region
          _
        $region20: #{gpt_forward.9} parent=11 // pred_fallthru
          _
        // Predicated region
        $region21: #{gpt_forward.9} parent=11 // pred_check
          %p168 = pneg %p119
        $region22: #{gpt_forward.9} parent=11 // pred_check_branch
          %170 = sbr.rel (%p168) target = $region24
        $region23: #{gpt_forward.9} parent=11 // pred_region
          %s171 = smul.u32 16, %s23
          %p172 = scmp.lt.s32.totalorder %s171, 15
          %s173 = scalar_select %p172, %s171, 15
          %s174 = smul.addr %s173, 4
          %s175 = scalar_lea.vmem %s3, %s174
          %s176 = smul.u32 16, %s23
        $region24: #{gpt_forward.9} parent=11 // pred_fallthru
          _
      $region12: #{gpt_forward.9} parent=5 // pred_fallthru
        _
      %p177 = scmp.lt.s32.totalorder %s13, 2
      // Predicated region
      $region25: #{gpt_forward.9} parent=5 // pred_check
        %p178 = pneg %p177
      $region26: #{gpt_forward.9} parent=5 // pred_check_branch
        %180 = sbr.rel (%p178) target = $region28
      $region27: #{gpt_forward.9} parent=5 // pred_region
        // Predicated region
        $region29: #{gpt_forward.9} parent=27 // pred_check
          %p181 = pneg %p45
        $region30: #{gpt_forward.9} parent=27 // pred_check_branch
          %183 = sbr.rel (%p181) target = $region32
        $region31: #{gpt_forward.9} parent=27 // pred_region
          %p184 = scmp.lt.s32.totalorder %s20, 1
          %s185 = scalar_select %p184, %s20, 1
          %s186 = smul.addr %s185, 8
          %s187 = scalar_lea.vmem %s0, %s186
        $region32: #{gpt_forward.9} parent=27 // pred_fallthru
          _
      $region28: #{gpt_forward.9} parent=5 // pred_fallthru
        _
      %p188 = scmp.le.s32.totalorder 1, %s13
      %p189 = scmp.lt.s32.totalorder %s13, 3
      %p190 = pnand %p188, %p189
      %p191 = pneg %p190
      // Predicated region
      $region33: #{gpt_forward.9} parent=5 // pred_check
        _
      $region34: #{gpt_forward.9} parent=5 // pred_check_branch
        %193 = sbr.rel (%p190) target = $region36
      $region35: #{gpt_forward.9} parent=5 // pred_region
        %s194 = ssub.s32 %s13, 1
        %p195 = scmp.lt.s32.totalorder %s22, 1
        %s196 = scalar_select %p195, %s22, 1
        %s197 = smul.addr %s196, 8
        %s198 = scalar_lea.vmem %s0, %s197
        %p199 = pneg %p51
        %p200 = pneg %p48
        %p201 = pneg %p72
        %p202 = pneg %p69
        %p203 = pneg %p93
        %p204 = pneg %p90
        %s205 = smul.u32 16, %s23
        %p206 = scmp.lt.s32.totalorder %s205, 15
        %s207 = scalar_select %p206, %s205, 15
        %s208 = smul.addr %s207, 4
        %s209 = scalar_lea.vmem %s3, %s208
        %p210 = pneg %p119
        %p211 = pneg %p116
        %p212 = pneg %p147
        %p213 = pneg %p144
        %s214 = sand.u32 %s134, 1
        %s215 = scalar_lea.sflag [#allocation4], %s214
        %s216 = sand.u32 %s134, 1
        %s217 = smul.addr %s216, 8
        %s218 = scalar_lea.vmem [#allocation3], %s217
        %p219 = scmp.lt.s32.totalorder %s22, 1
        %s220 = scalar_select %p219, %s22, 1
        %s221 = smul.addr %s220, 8
        %s222 = scalar_lea.vmem %s0, %s221
        %s223 = smul.u32 16, %s23
        %p224 = scmp.lt.s32.totalorder %s223, 15
        %s225 = scalar_select %p224, %s223, 15
        %s226 = smul.addr %s225, 4
        %s227 = scalar_lea.vmem %s3, %s226
        %s228 = smul.u32 16, %s23
        %p229 = scmp.eq.s32.totalorder %s23, 0
        // Predicated region
        $region37: #{gpt_forward.9} parent=35 // pred_check
          %p230 = pneg %p229
        $region38: #{gpt_forward.9} parent=35 // pred_check_branch
          %232 = sbr.rel (%p230) target = $region40
        $region39: #{gpt_forward.9} parent=35 // pred_region
          %v233 = vld [vmem:[%s222] sm:$0xff]
          %v234 = vld [vmem:[%s1] sm:$0x1]
          %v235 = vld [vmem:[%s2] sm:$0x1]
          %vm236 = vcmask 261120
          %v237 = vsel %vm236, %v233, 0.0
          %238 = vadd.xlane.f32.xlu0 %v237
          %v239 = vpop.xlane.xlu0 %238
          %v240 = vrcp.pop 32.0
          %v241 = vmul.f32 32.0, %v240
          %v242 = vsub.f32 1.0, %v241
          %v243 = vmul.f32 %v240, %v242
          %v244 = vadd.f32 %v240, %v243
          %vm245 = vweird.f32 %v240
          %v246 = vsel %vm245, %v240, %v244
          %v247 = vmul.f32 %v239, %v246
          %v248 = vsub.f32 %v233, %v247
          %v249 = vmul.f32 %v248, %v248
          %v250 = vsel %vm236, %v249, 0.0
          %251 = vadd.xlane.f32.xlu0 %v250
          %v252 = vpop.xlane.xlu0 %251
          %v253 = vmul.f32 %v252, %v246
          %v254 = vadd.f32 %v253, 1e-05
          %v255 = vrsqrt.pop %v254
          %v256 = vmul.f32 %v255, %v254
          %v257 = vmul.f32 %v256, %v255
          %v258 = vmul.f32 0.5, %v257
          %v259 = vsub.f32 1.5, %v258
          %v260 = vmul.f32 %v255, %v259
          %vm261 = vweird.f32 %v254
          %vm262 = vweird.f32 %v255
          %vm263 = vmor %vm261, %vm262
          %v264 = vsel %vm263, %v255, %v260
          %v265 = vmul.f32 %v248, %v264
          %v267 = vperm.slane %v234, 0
          %v269 = vmul.f32 %v265, %v267
          %v271 = vperm.slane %v235, 0
          %v273 = vadd.f32 %v269, %v271
          %v274 = vpack.c.bf16 %v273, %v273
          %vm275 = vcmask 257024
          %276 = vst.msk [vmem:[#allocation2] sm:$0xf] %vm275, %v274
        $region40: #{gpt_forward.9} parent=35 // pred_fallthru
          _
        %v277 = vld [vmem:[#allocation2] sm:$0xf]
        %v278 = vld [vmem:[%s227] sm:$0xf]
        %v279 = vld [vmem:[%s227 + $0x4] sm:$0xf]
        %v280 = vld [vmem:[%s227 + $0x8] sm:$0xf]
        %v281 = vld [vmem:[%s227 + $0xc] sm:$0xf]
        %v282 = vld [vmem:[%s227 + $0x10] sm:$0xf]
        %v283 = vld [vmem:[%s227 + $0x14] sm:$0xf]
        %v284 = vld [vmem:[%s227 + $0x18] sm:$0xf]
        %v285 = vld [vmem:[%s227 + $0x1c] sm:$0xf]
        %v286 = vld [vmem:[%s227 + $0x20] sm:$0xf]
        %v287 = vld [vmem:[%s227 + $0x24] sm:$0xf]
        %v288 = vld [vmem:[%s227 + $0x28] sm:$0xf]
        %v289 = vld [vmem:[%s227 + $0x2c] sm:$0xf]
        %v290 = vld [vmem:[%s227 + $0x30] sm:$0xf]
        %v291 = vld [vmem:[%s227 + $0x34] sm:$0xf]
        %v292 = vld [vmem:[%s227 + $0x38] sm:$0xf]
        %v293 = vld [vmem:[%s227 + $0x3c] sm:$0xf]
        %v310 = vunpack.c.l.b16 %v278
        %v311 = vunpack.c.l.b16 %v279
        %v312 = vunpack.c.l.b16 %v280
        %v313 = vunpack.c.l.b16 %v281
        %v314 = vunpack.c.l.b16 %v282
        %v315 = vunpack.c.l.b16 %v283
        %v316 = vunpack.c.l.b16 %v284
        %v317 = vunpack.c.l.b16 %v285
        %v318 = vunpack.c.l.b16 %v286
        %v319 = vunpack.c.l.b16 %v287
        %v320 = vunpack.c.l.b16 %v288
        %v321 = vunpack.c.l.b16 %v289
        %v322 = vunpack.c.l.b16 %v290
        %v323 = vunpack.c.l.b16 %v291
        %v324 = vunpack.c.l.b16 %v292
        %v325 = vunpack.c.l.b16 %v293
        %v326 = vpack.c.b16 %v311, %v310
        %v327 = vpack.c.b16 %v313, %v312
        %v328 = vpack.c.b16 %v315, %v314
        %v329 = vpack.c.b16 %v317, %v316
        %v330 = vpack.c.b16 %v319, %v318
        %v331 = vpack.c.b16 %v321, %v320
        %v332 = vpack.c.b16 %v323, %v322
        %v333 = vpack.c.b16 %v325, %v324
        %vm334 = vcmask 261120
        %v336 = vsel %vm334, %v277, 0
        %v339 = vsel %vm334, %v326, 0
        %v342 = vsel %vm334, %v327, 0
        %v345 = vsel %vm334, %v328, 0
        %v348 = vsel %vm334, %v329, 0
        %v351 = vsel %vm334, %v330, 0
        %v354 = vsel %vm334, %v331, 0
        %v357 = vsel %vm334, %v332, 0
        %v360 = vsel %vm334, %v333, 0
        %362 = vmatpush.bf16.xpose.msra.mxu0 %v360
        %363 = vmatpush.bf16.xpose.msra.mxu0 %v357
        %364 = vmatpush.bf16.xpose.msra.mxu0 %v354
        %365 = vmatpush.bf16.xpose.msra.mxu0 %v351
        %366 = vmatpush.bf16.xpose.msra.mxu0 %v348
        %367 = vmatpush.bf16.xpose.msra.mxu0 %v345
        %368 = vmatpush.bf16.xpose.msra.mxu0 %v342
        %369 = vmatpush.bf16.xpose.msra.mxu0 %v339
        %370 = vmatmul.bf16.gmra.mxu0 %v336
        %v371 = vpop.f32.mrf.mxu0
        %v372 = vadd.f32 0.0, %v371
        %v373 = vpop.f32.mrf.mxu0
        %374 = vdwg.mxu0
        %375 = vst [vmem:[%s218] sm:$0xff] %v372
        %s376 = sand.u32 %s134, 1
        %s377 = scalar_lea.sflag [#allocation4], %s376
        %s378 = sand.u32 %s134, 1
        %s379 = smul.addr %s378, 8
        %s380 = scalar_lea.vmem [#allocation3], %s379
        // Predicated region
        $region41: #{gpt_forward.9} parent=35 // pred_check
          %p381 = pneg %p144
        $region42: #{gpt_forward.9} parent=35 // pred_check_branch
          %383 = sbr.rel (%p381) target = $region44
        $region43: #{gpt_forward.9} parent=35 // pred_region
          %385 = vsyncadd %s377, 0
          %s386 = sadd.s32 %s23, %s22
          %s387 = smul.addr %s386, 8
          %s388 = scalar_lea.hbm %s4, %s387
          %s390 = sshll.u32 %s380, 4
          %s391 = int_to_ptr.vmem [resolvable:$true] %s390
          %s392 = sshll.u32 %s388, 4
          %s393 = int_to_ptr.hbm [resolvable:$true] %s392
          %395 = dma.vmem_to_hbm [thread:$0]  %s391, 128, %s393, %s377
        $region44: #{gpt_forward.9} parent=35 // pred_fallthru
          _
      $region36: #{gpt_forward.9} parent=5 // pred_fallthru
        _
      %p396 = scmp.le.s32.totalorder 2, %s13
      // Predicated region
      $region45: #{gpt_forward.9} parent=5 // pred_check
        %p397 = pneg %p396
      $region46: #{gpt_forward.9} parent=5 // pred_check_branch
        %399 = sbr.rel (%p397) target = $region48
      $region47: #{gpt_forward.9} parent=5 // pred_region
        %s400 = ssub.s32 %s13, 2
        // Predicated region
        $region49: #{gpt_forward.9} parent=47 // pred_check
          %p401 = pneg %p150
        $region50: #{gpt_forward.9} parent=47 // pred_check_branch
          %403 = sbr.rel (%p401) target = $region52
        $region51: #{gpt_forward.9} parent=47 // pred_region
          %s404 = sand.u32 %s135, 1
          %s405 = scalar_lea.sflag [#allocation4], %s404
          %s406 = sand.u32 %s135, 1
          %s407 = smul.addr %s406, 8
          %s408 = scalar_lea.vmem [#allocation3], %s407
          %410 = dma.done %s405, 128
        $region52: #{gpt_forward.9} parent=47 // pred_fallthru
          _
      $region48: #{gpt_forward.9} parent=5 // pred_fallthru
        _
    $region6: #{gpt_forward.9} parent=1 // loop_footer
      %s17 = sadd.s32 1, %s13
    $region7: #{gpt_forward.9} parent=1 // loop_footer_branch
      %12 = sbr.rel target = $region3
    $region8: #{gpt_forward.9} parent=1 // loop_exit
      _
    %411 = vsyncpa [#allocation4], 1
    %s412 = scalar_lea.sflag [#allocation4], 1
    %413 = vsyncpa %s412, 1

// kernel: gpt_forward.6
$region0: #{gpt_forward.6}
  #allocation0 [shape = 'u32[]', space=smem, size = 0x4, offset = 0x4, fixed_abs, tag = 'smem constant byte address 0x4 - core index']
  #allocation1 [shape = 'u32[72,128]{1,0:T(1,128)}', space=vmem, size = 0x9000, scoped, tag = 'internal scratch']
  #allocation2 [shape = 'f32[2,8,1]{2,1,0:T(8,128)}', space=vmem, size = 0x2000, scoped, tag = 'scratch operand']
  #allocation3 [shape = 'f32[2,8,1]{2,1,0:T(8,128)}', space=vmem, size = 0x2000, scoped, tag = 'scratch operand']
  #allocation4 [shape = 'f32[2,8,16]{2,1,0:T(8,128)}', space=vmem, size = 0x2000, scoped, tag = 'scratch operand']
  %s0 = inlined_call_operand.vmem [shape: f32[2,8,32], index: 0, kind: input, shape index: {}]
  %s1 = inlined_call_operand.vmem [shape: bf16[2,2,8,16], index: 1, kind: input, shape index: {}]
  %s2 = inlined_call_operand.vmem [shape: bf16[2,2,8,16], index: 2, kind: input, shape index: {}]
  %s3 = inlined_call_operand.vmem [shape: f32[1,32], index: 3, kind: input, shape index: {}]
  %s4 = inlined_call_operand.vmem [shape: f32[1,32], index: 4, kind: input, shape index: {}]
  %s5 = inlined_call_operand.vmem [shape: bf16[32,32], index: 5, kind: input, shape index: {}]
  %s6 = inlined_call_operand.vmem [shape: f32[1,32], index: 6, kind: input, shape index: {}]
  %s7 = inlined_call_operand.vmem [shape: bf16[32,32], index: 7, kind: input, shape index: {}]
  %s8 = inlined_call_operand.vmem [shape: f32[1,32], index: 8, kind: input, shape index: {}]
  %s9 = inlined_call_operand.vmem [shape: f32[1,32], index: 9, kind: input, shape index: {}]
  %s10 = inlined_call_operand.vmem [shape: f32[1,32], index: 10, kind: input, shape index: {}]
  %s11 = inlined_call_operand.vmem [shape: bf16[32,128], index: 11, kind: input, shape index: {}]
  %s12 = inlined_call_operand.vmem [shape: f32[1,128], index: 12, kind: input, shape index: {}]
  %s13 = inlined_call_operand.vmem [shape: bf16[128,32], index: 13, kind: input, shape index: {}]
  %s14 = inlined_call_operand.vmem [shape: f32[1,32], index: 14, kind: input, shape index: {}]
  %s15 = inlined_call_operand.vmem [shape: f32[2,8,32], index: 15, kind: output, shape index: {}]
  %s16 = sld [smem:[#allocation0]]
  $region100: #{gpt_forward.6} parent=0
    _
  %s18 = ssub.s32 1, %s16
  %s19 = scalar_select 0, %s18, %s16
  loop: start=0, step=1, limit=4
  $region2: #{gpt_forward.6} parent=0 // loop_pre_header
    _
  $region3: #{gpt_forward.6} parent=0 // loop_header
    %s21 = sphi 0, %s25
    %p22 = scmp.ge.s32.totalorder %s21, 4
    %s28 = sphi 0, %s40
    %s29 = sphi 0, %s36
    %s30 = sphi 0, %s28
    %s31 = sphi 0, %s29
    %s32 = sphi 0, %s30
    %s33 = sphi 0, %s31
    %s45 = sphi 0, %s47
    %s48 = sphi 0, %s45
    %s49 = sphi 0, %s48
    %s65 = sphi 0, %s49
    %s71 = sphi 0, %s73
    %s74 = sphi 0, %s71
    %s75 = sphi 0, %s74
    %s91 = sphi 0, %s75
    %s97 = sphi 0, %s99
    %s100 = sphi 0, %s97
    %s101 = sphi 0, %s100
    %s117 = sphi 0, %s101
    %s121 = sphi 0, %s121
    %s123 = sphi 0, %s121
    %s124 = sphi 0, %s123
    %s138 = sphi 0, %s124
    %s142 = sphi 0, %s142
    %s144 = sphi 0, %s142
    %s145 = sphi 0, %s144
    %s159 = sphi 0, %s145
    %s163 = sphi 0, %s163
    %s165 = sphi 0, %s163
    %s166 = sphi 0, %s165
    %s180 = sphi 0, %s166
    %s184 = sphi 0, %s184
    %s186 = sphi 0, %s184
    %s187 = sphi 0, %s186
    %s201 = sphi 0, %s187
    %s205 = sphi 0, %s205
    %s207 = sphi 0, %s205
    %s208 = sphi 0, %s207
    %s222 = sphi 0, %s208
    %s226 = sphi 0, %s226
    %s228 = sphi 0, %s226
    %s229 = sphi 0, %s228
    %s243 = sphi 0, %s229
    %s247 = sphi 0, %s247
    %s249 = sphi 0, %s247
    %s250 = sphi 0, %s249
    %s264 = sphi 0, %s250
    %s268 = sphi 0, %s268
    %s270 = sphi 0, %s268
    %s271 = sphi 0, %s270
    %s285 = sphi 0, %s271
    %s289 = sphi 0, %s289
    %s291 = sphi 0, %s289
    %s292 = sphi 0, %s291
    %s306 = sphi 0, %s292
    %s310 = sphi 0, %s310
    %s312 = sphi 0, %s310
    %s313 = sphi 0, %s312
    %s327 = sphi 0, %s313
    %s331 = sphi 0, %s331
    %s333 = sphi 0, %s331
    %s334 = sphi 0, %s333
    %s348 = sphi 0, %s334
    %s352 = sphi 0, %s352
    %s354 = sphi 0, %s352
    %s355 = sphi 0, %s354
    %s369 = sphi 0, %s355
    %s377 = sphi 0, %s379
    %s380 = sphi 0, %s377
    %s381 = sphi 0, %s380
    %s397 = sphi 0, %s381
  $region4: #{gpt_forward.6} parent=0 // loop_header_branch
    %24 = sbr.rel (%p22) target = $region8
  $region5: #{gpt_forward.6} parent=0 // loop_body
    %s26 = ssub.s32 %s21, 1
    %s27 = ssub.s32 %s21, 2
    %s34 = sadd.s32 1, %s29
    %p35 = scmp.ge.s32.totalorder %s34, 1
    %s36 = scalar_select %p35, 0, %s34
    %s37 = sadd.s32 1, %s28
    %s38 = scalar_select %p35, %s37, %s28
    %p39 = scmp.ge.s32.totalorder %s38, 2
    %s40 = scalar_select %p39, 0, %s38
    %s41 = ssub.s32 %s28, %s40
    %s42 = ssub.s32 %s29, %s36
    %s43 = sor.u32 %s41, %s42
    %p44 = scmp.eq.s32.totalorder %s43, 0
    %s46 = sadd.s32 %s45, 1
    %s47 = scalar_select %p44, %s45, %s46
    %p50 = pneg %p44
    %p51 = scmp.eq.s32.totalorder %s21, 1
    %p52 = por %p50, %p51
    %p53 = scmp.ne.s32.totalorder %s45, %s48
    %p54 = scmp.eq.s32.totalorder %s21, 0
    %p55 = por %p53, %p54
    %p56 = scmp.ne.s32.totalorder %s45, %s48
    %p57 = scmp.eq.s32.totalorder %s26, 1
    %p58 = por %p56, %p57
    %p59 = scmp.ne.s32.totalorder %s48, %s49
    %p60 = scmp.eq.s32.totalorder %s26, 0
    %p61 = por %p59, %p60
    %p62 = scmp.ne.s32.totalorder %s48, %s49
    %p63 = scmp.eq.s32.totalorder %s27, 1
    %p64 = por %p62, %p63
    %p66 = scmp.ne.s32.totalorder %s49, %s65
    %p67 = scmp.eq.s32.totalorder %s27, 0
    %p68 = por %p66, %p67
    %s69 = ssub.s32 %s28, %s40
    %p70 = scmp.eq.s32.totalorder %s69, 0
    %s72 = sadd.s32 %s71, 1
    %s73 = scalar_select %p70, %s71, %s72
    %p76 = pneg %p70
    %p77 = scmp.eq.s32.totalorder %s21, 1
    %p78 = por %p76, %p77
    %p79 = scmp.ne.s32.totalorder %s71, %s74
    %p80 = scmp.eq.s32.totalorder %s21, 0
    %p81 = por %p79, %p80
    %p82 = scmp.ne.s32.totalorder %s71, %s74
    %p83 = scmp.eq.s32.totalorder %s26, 1
    %p84 = por %p82, %p83
    %p85 = scmp.ne.s32.totalorder %s74, %s75
    %p86 = scmp.eq.s32.totalorder %s26, 0
    %p87 = por %p85, %p86
    %p88 = scmp.ne.s32.totalorder %s74, %s75
    %p89 = scmp.eq.s32.totalorder %s27, 1
    %p90 = por %p88, %p89
    %p92 = scmp.ne.s32.totalorder %s75, %s91
    %p93 = scmp.eq.s32.totalorder %s27, 0
    %p94 = por %p92, %p93
    %s95 = ssub.s32 %s28, %s40
    %p96 = scmp.eq.s32.totalorder %s95, 0
    %s98 = sadd.s32 %s97, 1
    %s99 = scalar_select %p96, %s97, %s98
    %p102 = pneg %p96
    %p103 = scmp.eq.s32.totalorder %s21, 1
    %p104 = por %p102, %p103
    %p105 = scmp.ne.s32.totalorder %s97, %s100
    %p106 = scmp.eq.s32.totalorder %s21, 0
    %p107 = por %p105, %p106
    %p108 = scmp.ne.s32.totalorder %s97, %s100
    %p109 = scmp.eq.s32.totalorder %s26, 1
    %p110 = por %p108, %p109
    %p111 = scmp.ne.s32.totalorder %s100, %s101
    %p112 = scmp.eq.s32.totalorder %s26, 0
    %p113 = por %p111, %p112
    %p114 = scmp.ne.s32.totalorder %s100, %s101
    %p115 = scmp.eq.s32.totalorder %s27, 1
    %p116 = por %p114, %p115
    %p118 = scmp.ne.s32.totalorder %s101, %s117
    %p119 = scmp.eq.s32.totalorder %s27, 0
    %p120 = por %p118, %p119
    %s122 = sadd.s32 %s121, 1
    %p125 = scmp.eq.s32.totalorder %s21, 1
    %p126 = scmp.ne.s32.totalorder %s121, %s123
    %p127 = scmp.eq.s32.totalorder %s21, 0
    %p128 = por %p126, %p127
    %p129 = scmp.ne.s32.totalorder %s121, %s123
    %p130 = scmp.eq.s32.totalorder %s26, 1
    %p131 = por %p129, %p130
    %p132 = scmp.ne.s32.totalorder %s123, %s124
    %p133 = scmp.eq.s32.totalorder %s26, 0
    %p134 = por %p132, %p133
    %p135 = scmp.ne.s32.totalorder %s123, %s124
    %p136 = scmp.eq.s32.totalorder %s27, 1
    %p137 = por %p135, %p136
    %p139 = scmp.ne.s32.totalorder %s124, %s138
    %p140 = scmp.eq.s32.totalorder %s27, 0
    %p141 = por %p139, %p140
    %s143 = sadd.s32 %s142, 1
    %p146 = scmp.eq.s32.totalorder %s21, 1
    %p147 = scmp.ne.s32.totalorder %s142, %s144
    %p148 = scmp.eq.s32.totalorder %s21, 0
    %p149 = por %p147, %p148
    %p150 = scmp.ne.s32.totalorder %s142, %s144
    %p151 = scmp.eq.s32.totalorder %s26, 1
    %p152 = por %p150, %p151
    %p153 = scmp.ne.s32.totalorder %s144, %s145
    %p154 = scmp.eq.s32.totalorder %s26, 0
    %p155 = por %p153, %p154
    %p156 = scmp.ne.s32.totalorder %s144, %s145
    %p157 = scmp.eq.s32.totalorder %s27, 1
    %p158 = por %p156, %p157
    %p160 = scmp.ne.s32.totalorder %s145, %s159
    %p161 = scmp.eq.s32.totalorder %s27, 0
    %p162 = por %p160, %p161
    %s164 = sadd.s32 %s163, 1
    %p167 = scmp.eq.s32.totalorder %s21, 1
    %p168 = scmp.ne.s32.totalorder %s163, %s165
    %p169 = scmp.eq.s32.totalorder %s21, 0
    %p170 = por %p168, %p169
    %p171 = scmp.ne.s32.totalorder %s163, %s165
    %p172 = scmp.eq.s32.totalorder %s26, 1
    %p173 = por %p171, %p172
    %p174 = scmp.ne.s32.totalorder %s165, %s166
    %p175 = scmp.eq.s32.totalorder %s26, 0
    %p176 = por %p174, %p175
    %p177 = scmp.ne.s32.totalorder %s165, %s166
    %p178 = scmp.eq.s32.totalorder %s27, 1
    %p179 = por %p177, %p178
    %p181 = scmp.ne.s32.totalorder %s166, %s180
    %p182 = scmp.eq.s32.totalorder %s27, 0
    %p183 = por %p181, %p182
    %s185 = sadd.s32 %s184, 1
    %p188 = scmp.eq.s32.totalorder %s21, 1
    %p189 = scmp.ne.s32.totalorder %s184, %s186
    %p190 = scmp.eq.s32.totalorder %s21, 0
    %p191 = por %p189, %p190
    %p192 = scmp.ne.s32.totalorder %s184, %s186
    %p193 = scmp.eq.s32.totalorder %s26, 1
    %p194 = por %p192, %p193
    %p195 = scmp.ne.s32.totalorder %s186, %s187
    %p196 = scmp.eq.s32.totalorder %s26, 0
    %p197 = por %p195, %p196
    %p198 = scmp.ne.s32.totalorder %s186, %s187
    %p199 = scmp.eq.s32.totalorder %s27, 1
    %p200 = por %p198, %p199
    %p202 = scmp.ne.s32.totalorder %s187, %s201
    %p203 = scmp.eq.s32.totalorder %s27, 0
    %p204 = por %p202, %p203
    %s206 = sadd.s32 %s205, 1
    %p209 = scmp.eq.s32.totalorder %s21, 1
    %p210 = scmp.ne.s32.totalorder %s205, %s207
    %p211 = scmp.eq.s32.totalorder %s21, 0
    %p212 = por %p210, %p211
    %p213 = scmp.ne.s32.totalorder %s205, %s207
    %p214 = scmp.eq.s32.totalorder %s26, 1
    %p215 = por %p213, %p214
    %p216 = scmp.ne.s32.totalorder %s207, %s208
    %p217 = scmp.eq.s32.totalorder %s26, 0
    %p218 = por %p216, %p217
    %p219 = scmp.ne.s32.totalorder %s207, %s208
    %p220 = scmp.eq.s32.totalorder %s27, 1
    %p221 = por %p219, %p220
    %p223 = scmp.ne.s32.totalorder %s208, %s222
    %p224 = scmp.eq.s32.totalorder %s27, 0
    %p225 = por %p223, %p224
    %s227 = sadd.s32 %s226, 1
    %p230 = scmp.eq.s32.totalorder %s21, 1
    %p231 = scmp.ne.s32.totalorder %s226, %s228
    %p232 = scmp.eq.s32.totalorder %s21, 0
    %p233 = por %p231, %p232
    %p234 = scmp.ne.s32.totalorder %s226, %s228
    %p235 = scmp.eq.s32.totalorder %s26, 1
    %p236 = por %p234, %p235
    %p237 = scmp.ne.s32.totalorder %s228, %s229
    %p238 = scmp.eq.s32.totalorder %s26, 0
    %p239 = por %p237, %p238
    %p240 = scmp.ne.s32.totalorder %s228, %s229
    %p241 = scmp.eq.s32.totalorder %s27, 1
    %p242 = por %p240, %p241
    %p244 = scmp.ne.s32.totalorder %s229, %s243
    %p245 = scmp.eq.s32.totalorder %s27, 0
    %p246 = por %p244, %p245
    %s248 = sadd.s32 %s247, 1
    %p251 = scmp.eq.s32.totalorder %s21, 1
    %p252 = scmp.ne.s32.totalorder %s247, %s249
    %p253 = scmp.eq.s32.totalorder %s21, 0
    %p254 = por %p252, %p253
    %p255 = scmp.ne.s32.totalorder %s247, %s249
    %p256 = scmp.eq.s32.totalorder %s26, 1
    %p257 = por %p255, %p256
    %p258 = scmp.ne.s32.totalorder %s249, %s250
    %p259 = scmp.eq.s32.totalorder %s26, 0
    %p260 = por %p258, %p259
    %p261 = scmp.ne.s32.totalorder %s249, %s250
    %p262 = scmp.eq.s32.totalorder %s27, 1
    %p263 = por %p261, %p262
    %p265 = scmp.ne.s32.totalorder %s250, %s264
    %p266 = scmp.eq.s32.totalorder %s27, 0
    %p267 = por %p265, %p266
    %s269 = sadd.s32 %s268, 1
    %p272 = scmp.eq.s32.totalorder %s21, 1
    %p273 = scmp.ne.s32.totalorder %s268, %s270
    %p274 = scmp.eq.s32.totalorder %s21, 0
    %p275 = por %p273, %p274
    %p276 = scmp.ne.s32.totalorder %s268, %s270
    %p277 = scmp.eq.s32.totalorder %s26, 1
    %p278 = por %p276, %p277
    %p279 = scmp.ne.s32.totalorder %s270, %s271
    %p280 = scmp.eq.s32.totalorder %s26, 0
    %p281 = por %p279, %p280
    %p282 = scmp.ne.s32.totalorder %s270, %s271
    %p283 = scmp.eq.s32.totalorder %s27, 1
    %p284 = por %p282, %p283
    %p286 = scmp.ne.s32.totalorder %s271, %s285
    %p287 = scmp.eq.s32.totalorder %s27, 0
    %p288 = por %p286, %p287
    %s290 = sadd.s32 %s289, 1
    %p293 = scmp.eq.s32.totalorder %s21, 1
    %p294 = scmp.ne.s32.totalorder %s289, %s291
    %p295 = scmp.eq.s32.totalorder %s21, 0
    %p296 = por %p294, %p295
    %p297 = scmp.ne.s32.totalorder %s289, %s291
    %p298 = scmp.eq.s32.totalorder %s26, 1
    %p299 = por %p297, %p298
    %p300 = scmp.ne.s32.totalorder %s291, %s292
    %p301 = scmp.eq.s32.totalorder %s26, 0
    %p302 = por %p300, %p301
    %p303 = scmp.ne.s32.totalorder %s291, %s292
    %p304 = scmp.eq.s32.totalorder %s27, 1
    %p305 = por %p303, %p304
    %p307 = scmp.ne.s32.totalorder %s292, %s306
    %p308 = scmp.eq.s32.totalorder %s27, 0
    %p309 = por %p307, %p308
    %s311 = sadd.s32 %s310, 1
    %p314 = scmp.eq.s32.totalorder %s21, 1
    %p315 = scmp.ne.s32.totalorder %s310, %s312
    %p316 = scmp.eq.s32.totalorder %s21, 0
    %p317 = por %p315, %p316
    %p318 = scmp.ne.s32.totalorder %s310, %s312
    %p319 = scmp.eq.s32.totalorder %s26, 1
    %p320 = por %p318, %p319
    %p321 = scmp.ne.s32.totalorder %s312, %s313
    %p322 = scmp.eq.s32.totalorder %s26, 0
    %p323 = por %p321, %p322
    %p324 = scmp.ne.s32.totalorder %s312, %s313
    %p325 = scmp.eq.s32.totalorder %s27, 1
    %p326 = por %p324, %p325
    %p328 = scmp.ne.s32.totalorder %s313, %s327
    %p329 = scmp.eq.s32.totalorder %s27, 0
    %p330 = por %p328, %p329
    %s332 = sadd.s32 %s331, 1
    %p335 = scmp.eq.s32.totalorder %s21, 1
    %p336 = scmp.ne.s32.totalorder %s331, %s333
    %p337 = scmp.eq.s32.totalorder %s21, 0
    %p338 = por %p336, %p337
    %p339 = scmp.ne.s32.totalorder %s331, %s333
    %p340 = scmp.eq.s32.totalorder %s26, 1
    %p341 = por %p339, %p340
    %p342 = scmp.ne.s32.totalorder %s333, %s334
    %p343 = scmp.eq.s32.totalorder %s26, 0
    %p344 = por %p342, %p343
    %p345 = scmp.ne.s32.totalorder %s333, %s334
    %p346 = scmp.eq.s32.totalorder %s27, 1
    %p347 = por %p345, %p346
    %p349 = scmp.ne.s32.totalorder %s334, %s348
    %p350 = scmp.eq.s32.totalorder %s27, 0
    %p351 = por %p349, %p350
    %s353 = sadd.s32 %s352, 1
    %p356 = scmp.eq.s32.totalorder %s21, 1
    %p357 = scmp.ne.s32.totalorder %s352, %s354
    %p358 = scmp.eq.s32.totalorder %s21, 0
    %p359 = por %p357, %p358
    %p360 = scmp.ne.s32.totalorder %s352, %s354
    %p361 = scmp.eq.s32.totalorder %s26, 1
    %p362 = por %p360, %p361
    %p363 = scmp.ne.s32.totalorder %s354, %s355
    %p364 = scmp.eq.s32.totalorder %s26, 0
    %p365 = por %p363, %p364
    %p366 = scmp.ne.s32.totalorder %s354, %s355
    %p367 = scmp.eq.s32.totalorder %s27, 1
    %p368 = por %p366, %p367
    %p370 = scmp.ne.s32.totalorder %s355, %s369
    %p371 = scmp.eq.s32.totalorder %s27, 0
    %p372 = por %p370, %p371
    %s373 = ssub.s32 %s28, %s40
    %s374 = ssub.s32 %s29, %s36
    %s375 = sor.u32 %s373, %s374
    %p376 = scmp.eq.s32.totalorder %s375, 0
    %s378 = sadd.s32 %s377, 1
    %s379 = scalar_select %p376, %s377, %s378
    %p382 = pneg %p376
    %p383 = scmp.eq.s32.totalorder %s21, 1
    %p384 = por %p382, %p383
    %p385 = scmp.ne.s32.totalorder %s377, %s380
    %p386 = scmp.eq.s32.totalorder %s21, 0
    %p387 = por %p385, %p386
    %p388 = scmp.ne.s32.totalorder %s377, %s380
    %p389 = scmp.eq.s32.totalorder %s26, 1
    %p390 = por %p388, %p389
    %p391 = scmp.ne.s32.totalorder %s380, %s381
    %p392 = scmp.eq.s32.totalorder %s26, 0
    %p393 = por %p391, %p392
    %p394 = scmp.ne.s32.totalorder %s380, %s381
    %p395 = scmp.eq.s32.totalorder %s27, 1
    %p396 = por %p394, %p395
    %p398 = scmp.ne.s32.totalorder %s381, %s397
    %p399 = scmp.eq.s32.totalorder %s27, 0
    %p400 = por %p398, %p399
    %p401 = scmp.le.s32.totalorder 1, %s21
    %p402 = scmp.lt.s32.totalorder %s21, 3
    %p403 = pnand %p401, %p402
    %p404 = pneg %p403
    // Predicated region
    $region9: #{gpt_forward.6} parent=5 // pred_check
      _
    $region10: #{gpt_forward.6} parent=5 // pred_check_branch
      %406 = sbr.rel (%p403) target = $region12
    $region11: #{gpt_forward.6} parent=5 // pred_region
      %s407 = ssub.s32 %s21, 1
      // Predicated region
      $region13: #{gpt_forward.6} parent=11 // pred_check
        %p408 = pneg %p134
      $region14: #{gpt_forward.6} parent=11 // pred_check_branch
        %410 = sbr.rel (%p408) target = $region16
      $region15: #{gpt_forward.6} parent=11 // pred_region
        _
      $region16: #{gpt_forward.6} parent=11 // pred_fallthru
        _
      // Predicated region
      $region17: #{gpt_forward.6} parent=11 // pred_check
        %p411 = pneg %p155
      $region18: #{gpt_forward.6} parent=11 // pred_check_branch
        %413 = sbr.rel (%p411) target = $region20
      $region19: #{gpt_forward.6} parent=11 // pred_region
        _
      $region20: #{gpt_forward.6} parent=11 // pred_fallthru
        _
      // Predicated region
      $region21: #{gpt_forward.6} parent=11 // pred_check
        %p414 = pneg %p176
      $region22: #{gpt_forward.6} parent=11 // pred_check_branch
        %416 = sbr.rel (%p414) target = $region24
      $region23: #{gpt_forward.6} parent=11 // pred_region
        _
      $region24: #{gpt_forward.6} parent=11 // pred_fallthru
        _
      // Predicated region
      $region25: #{gpt_forward.6} parent=11 // pred_check
        %p417 = pneg %p197
      $region26: #{gpt_forward.6} parent=11 // pred_check_branch
        %419 = sbr.rel (%p417) target = $region28
      $region27: #{gpt_forward.6} parent=11 // pred_region
        _
      $region28: #{gpt_forward.6} parent=11 // pred_fallthru
        _
      // Predicated region
      $region29: #{gpt_forward.6} parent=11 // pred_check
        %p420 = pneg %p218
      $region30: #{gpt_forward.6} parent=11 // pred_check_branch
        %422 = sbr.rel (%p420) target = $region32
      $region31: #{gpt_forward.6} parent=11 // pred_region
        _
      $region32: #{gpt_forward.6} parent=11 // pred_fallthru
        _
      // Predicated region
      $region33: #{gpt_forward.6} parent=11 // pred_check
        %p423 = pneg %p239
      $region34: #{gpt_forward.6} parent=11 // pred_check_branch
        %425 = sbr.rel (%p423) target = $region36
      $region35: #{gpt_forward.6} parent=11 // pred_region
        _
      $region36: #{gpt_forward.6} parent=11 // pred_fallthru
        _
      // Predicated region
      $region37: #{gpt_forward.6} parent=11 // pred_check
        %p426 = pneg %p260
      $region38: #{gpt_forward.6} parent=11 // pred_check_branch
        %428 = sbr.rel (%p426) target = $region40
      $region39: #{gpt_forward.6} parent=11 // pred_region
        _
      $region40: #{gpt_forward.6} parent=11 // pred_fallthru
        _
      // Predicated region
      $region41: #{gpt_forward.6} parent=11 // pred_check
        %p429 = pneg %p281
      $region42: #{gpt_forward.6} parent=11 // pred_check_branch
        %431 = sbr.rel (%p429) target = $region44
      $region43: #{gpt_forward.6} parent=11 // pred_region
        _
      $region44: #{gpt_forward.6} parent=11 // pred_fallthru
        _
      // Predicated region
      $region45: #{gpt_forward.6} parent=11 // pred_check
        %p432 = pneg %p302
      $region46: #{gpt_forward.6} parent=11 // pred_check_branch
        %434 = sbr.rel (%p432) target = $region48
      $region47: #{gpt_forward.6} parent=11 // pred_region
        _
      $region48: #{gpt_forward.6} parent=11 // pred_fallthru
        _
      // Predicated region
      $region49: #{gpt_forward.6} parent=11 // pred_check
        %p435 = pneg %p323
      $region50: #{gpt_forward.6} parent=11 // pred_check_branch
        %437 = sbr.rel (%p435) target = $region52
      $region51: #{gpt_forward.6} parent=11 // pred_region
        _
      $region52: #{gpt_forward.6} parent=11 // pred_fallthru
        _
      // Predicated region
      $region53: #{gpt_forward.6} parent=11 // pred_check
        %p438 = pneg %p344
      $region54: #{gpt_forward.6} parent=11 // pred_check_branch
        %440 = sbr.rel (%p438) target = $region56
      $region55: #{gpt_forward.6} parent=11 // pred_region
        _
      $region56: #{gpt_forward.6} parent=11 // pred_fallthru
        _
      // Predicated region
      $region57: #{gpt_forward.6} parent=11 // pred_check
        %p441 = pneg %p365
      $region58: #{gpt_forward.6} parent=11 // pred_check_branch
        %443 = sbr.rel (%p441) target = $region60
      $region59: #{gpt_forward.6} parent=11 // pred_region
        _
      $region60: #{gpt_forward.6} parent=11 // pred_fallthru
        _
    $region12: #{gpt_forward.6} parent=5 // pred_fallthru
      _
    %p444 = scmp.lt.s32.totalorder %s21, 2
    // Predicated region
    $region61: #{gpt_forward.6} parent=5 // pred_check
      %p445 = pneg %p444
    $region62: #{gpt_forward.6} parent=5 // pred_check_branch
      %447 = sbr.rel (%p445) target = $region64
    $region63: #{gpt_forward.6} parent=5 // pred_region
      // Predicated region
      $region65: #{gpt_forward.6} parent=63 // pred_check
        %p448 = pneg %p55
      $region66: #{gpt_forward.6} parent=63 // pred_check_branch
        %450 = sbr.rel (%p448) target = $region68
      $region67: #{gpt_forward.6} parent=63 // pred_region
        %p451 = scmp.lt.s32.totalorder %s28, 1
        %s452 = scalar_select %p451, %s28, 1
        %p453 = scmp.lt.s32.totalorder %s29, 0
        %s454 = scalar_select %p453, %s29, 0
        %s455 = sadd.s32 %s454, %s452
        %s456 = smul.addr %s455, 8
        %s457 = scalar_lea.vmem %s0, %s456
      $region68: #{gpt_forward.6} parent=63 // pred_fallthru
        _
      // Predicated region
      $region69: #{gpt_forward.6} parent=63 // pred_check
        %p458 = pneg %p81
      $region70: #{gpt_forward.6} parent=63 // pred_check_branch
        %460 = sbr.rel (%p458) target = $region72
      $region71: #{gpt_forward.6} parent=63 // pred_region
        %p461 = scmp.lt.s32.totalorder %s28, 1
        %s462 = scalar_select %p461, %s28, 1
        %s463 = smul.addr %s462, 2
        %s464 = smul.addr %s463, 4
        %s465 = scalar_lea.vmem %s1, %s464
      $region72: #{gpt_forward.6} parent=63 // pred_fallthru
        _
      // Predicated region
      $region73: #{gpt_forward.6} parent=63 // pred_check
        %p466 = pneg %p107
      $region74: #{gpt_forward.6} parent=63 // pred_check_branch
        %468 = sbr.rel (%p466) target = $region76
      $region75: #{gpt_forward.6} parent=63 // pred_region
        %p469 = scmp.lt.s32.totalorder %s28, 1
        %s470 = scalar_select %p469, %s28, 1
        %s471 = smul.addr %s470, 2
        %s472 = smul.addr %s471, 4
        %s473 = scalar_lea.vmem %s2, %s472
      $region76: #{gpt_forward.6} parent=63 // pred_fallthru
        _
    $region64: #{gpt_forward.6} parent=5 // pred_fallthru
      _
    %p474 = scmp.le.s32.totalorder 1, %s21
    %p475 = scmp.lt.s32.totalorder %s21, 3
    %p476 = pnand %p474, %p475
    %p477 = pneg %p476
    // Predicated region
    $region77: #{gpt_forward.6} parent=5 // pred_check
      _
    $region78: #{gpt_forward.6} parent=5 // pred_check_branch
      %479 = sbr.rel (%p476) target = $region80
    $region79: #{gpt_forward.6} parent=5 // pred_region
      %s480 = ssub.s32 %s21, 1
      %p481 = scmp.lt.s32.totalorder %s30, 1
      %s482 = scalar_select %p481, %s30, 1
      %p483 = scmp.lt.s32.totalorder %s31, 0
      %s484 = scalar_select %p483, %s31, 0
      %s485 = sadd.s32 %s484, %s482
      %s486 = smul.addr %s485, 8
      %s487 = scalar_lea.vmem %s0, %s486
      %p488 = pneg %p61
      %p489 = pneg %p58
      %p490 = scmp.lt.s32.totalorder %s30, 1
      %s491 = scalar_select %p490, %s30, 1
      %s492 = smul.addr %s491, 2
      %s493 = smul.addr %s492, 4
      %s494 = scalar_lea.vmem %s1, %s493
      %p495 = pneg %p87
      %p496 = pneg %p84
      %p497 = scmp.lt.s32.totalorder %s30, 1
      %s498 = scalar_select %p497, %s30, 1
      %s499 = smul.addr %s498, 2
      %s500 = smul.addr %s499, 4
      %s501 = scalar_lea.vmem %s2, %s500
      %p502 = pneg %p113
      %p503 = pneg %p110
      %p504 = pneg %p134
      %p505 = pneg %p131
      %p506 = pneg %p155
      %p507 = pneg %p152
      %p508 = pneg %p176
      %p509 = pneg %p173
      %p510 = pneg %p197
      %p511 = pneg %p194
      %p512 = pneg %p218
      %p513 = pneg %p215
      %p514 = pneg %p239
      %p515 = pneg %p236
      %p516 = pneg %p260
      %p517 = pneg %p257
      %p518 = pneg %p281
      %p519 = pneg %p278
      %p520 = pneg %p302
      %p521 = pneg %p299
      %p522 = pneg %p323
      %p523 = pneg %p320
      %p524 = pneg %p344
      %p525 = pneg %p341
      %p526 = pneg %p365
      %p527 = pneg %p362
      %p528 = pneg %p393
      %p529 = pneg %p390
      %p530 = scmp.lt.s32.totalorder %s30, 1
      %s531 = scalar_select %p530, %s30, 1
      %p532 = scmp.lt.s32.totalorder %s31, 0
      %s533 = scalar_select %p532, %s31, 0
      %s534 = sadd.s32 %s533, %s531
      %s535 = smul.addr %s534, 8
      %s536 = scalar_lea.vmem %s15, %s535
      %p537 = scmp.lt.s32.totalorder %s30, 1
      %s538 = scalar_select %p537, %s30, 1
      %p539 = scmp.lt.s32.totalorder %s31, 0
      %s540 = scalar_select %p539, %s31, 0
      %s541 = sadd.s32 %s540, %s538
      %s542 = smul.addr %s541, 8
      %s543 = scalar_lea.vmem %s0, %s542
      %p544 = scmp.lt.s32.totalorder %s30, 1
      %s545 = scalar_select %p544, %s30, 1
      %s546 = smul.addr %s545, 2
      %s547 = smul.addr %s546, 4
      %s548 = scalar_lea.vmem %s1, %s547
      %p549 = scmp.lt.s32.totalorder %s30, 1
      %s550 = scalar_select %p549, %s30, 1
      %s551 = smul.addr %s550, 2
      %s552 = smul.addr %s551, 4
      %s553 = scalar_lea.vmem %s2, %s552
      %p554 = scmp.lt.s32.totalorder %s30, 1
      %s555 = scalar_select %p554, %s30, 1
      %p556 = scmp.lt.s32.totalorder %s31, 0
      %s557 = scalar_select %p556, %s31, 0
      %s558 = sadd.s32 %s557, %s555
      %s559 = smul.addr %s558, 8
      %s560 = scalar_lea.vmem %s15, %s559
      %v562 = vld [vmem:[%s543] sm:$0xff]
      %v563 = vld [vmem:[%s3] sm:$0x1]
      %v564 = vld [vmem:[%s4] sm:$0x1]
      %vm565 = vcmask 261120
      %v566 = vsel %vm565, %v562, 0.0
      %567 = vadd.xlane.f32.xlu0 %v566
      %v568 = vpop.xlane.xlu0 %567
      %v569 = vrcp.pop 32.0
      %v570 = vmul.f32 32.0, %v569
      %v571 = vsub.f32 1.0, %v570
      %v572 = vmul.f32 %v569, %v571
      %v573 = vadd.f32 %v569, %v572
      %vm574 = vweird.f32 %v569
      %v575 = vsel %vm574, %v569, %v573
      %v576 = vmul.f32 %v568, %v575
      %v577 = vsub.f32 %v562, %v576
      %v578 = vmul.f32 %v577, %v577
      %v579 = vsel %vm565, %v578, 0.0
      %580 = vadd.xlane.f32.xlu0 %v579
      %v581 = vpop.xlane.xlu0 %580
      %v582 = vmul.f32 %v581, %v575
      %v583 = vadd.f32 %v582, 1e-05
      %v584 = vrsqrt.pop %v583
      %v585 = vmul.f32 %v584, %v583
      %v586 = vmul.f32 %v585, %v584
      %v587 = vmul.f32 0.5, %v586
      %v588 = vsub.f32 1.5, %v587
      %v589 = vmul.f32 %v584, %v588
      %vm590 = vweird.f32 %v583
      %vm591 = vweird.f32 %v584
      %vm592 = vmor %vm590, %vm591
      %v593 = vsel %vm592, %v584, %v589
      %v594 = vmul.f32 %v577, %v593
      %v596 = vperm.slane %v563, 0
      %v598 = vmul.f32 %v594, %v596
      %v600 = vperm.slane %v564, 0
      %v602 = vadd.f32 %v598, %v600
      %v603 = vpack.c.bf16 %v602, %v602
      %v604 = vld [vmem:[%s5] sm:$0xf]
      %v605 = vld [vmem:[%s5 + $0x4] sm:$0xf]
      %v606 = vld [vmem:[%s5 + $0x8] sm:$0xf]
      %v607 = vld [vmem:[%s5 + $0xc] sm:$0xf]
      %v608 = vld [vmem:[%s6] sm:$0x1]
      %v610 = vperm.slane %v608, 0
      %v616 = vunpack.c.l.b16 %v604
      %v617 = vunpack.c.l.b16 %v605
      %v618 = vunpack.c.l.b16 %v606
      %v619 = vunpack.c.l.b16 %v607
      %v620 = vpack.c.b16 %v617, %v616
      %v621 = vpack.c.b16 %v619, %v618
      %v625 = vsel %vm565, %v603, 0
      %627 = vmatpush.bf16.msra.mxu0 0
      %628 = vmatpush.bf16.msra.mxu0 0
      %629 = vmatpush.bf16.msra.mxu0 0
      %630 = vmatpush.bf16.msra.mxu0 0
      %631 = vmatpush.bf16.msra.mxu0 0
      %632 = vmatpush.bf16.msra.mxu0 0
      %633 = vmatpush.bf16.msra.mxu0 %v621
      %634 = vmatpush.bf16.msra.mxu0 %v620
      %635 = vmatmul.bf16.gmra.mxu0 %v625
      %v636 = vpop.f32.mrf.mxu0
      %v637 = vadd.f32 %v610, %v636
      %v638 = vpop.f32.mrf.mxu0
      %639 = vdwg.mxu0
      %v640 = vmul.f32 %v637, 0.25
      %642 = vrot.lane.b32.xlu0 %v640, 112
      %v643 = vpop.permute.xlu0 %642
      %v645 = vpack.c.bf16 %v640, %v640
      %v646 = vpack.c.bf16 %v643, %v643
      %vm647 = vcmask 7168
      %648 = vst.msk [vmem:[#allocation2] sm:$0xff] %vm647, -1e+30
      %649 = vst.msk [vmem:[#allocation2 + $0x8] sm:$0xff] %vm647, -1e+30
      %650 = vst.msk [vmem:[#allocation3] sm:$0xff] %vm647, 0.0
      %651 = vst.msk [vmem:[#allocation3 + $0x8] sm:$0xff] %vm647, 0.0
      %vm652 = vcmask 130048
      %653 = vst.msk [vmem:[#allocation4] sm:$0xff] %vm652, 0.0
      %654 = vst.msk [vmem:[#allocation4 + $0x8] sm:$0xff] %vm652, 0.0
      // While loop
      $region81: #{gpt_forward.6} parent=79 // loop_pre_header
        _
      $region82: #{gpt_forward.6} parent=79 // loop_header
        %s656 = sphi 0, %s658
        %p657 = scmp.ge.s32.totalorder %s656, %s31
      $region83: #{gpt_forward.6} parent=79 // loop_header_branch
        %660 = sbr.rel (%p657) target = $region87
      $region84: #{gpt_forward.6} parent=79 // loop_body
        %s661 = smul.u32 %s656, 8
        %s662 = sshra.s32 %s661, 3
        %s663 = sand.u32 %s661, 7
        %s664 = smul.addr %s662, 4
        %s665 = scalar_lea.vmem %s548, %s664
        %v666 = vld [vmem:[%s665] sm:$0xf]
        %v667 = vld [vmem:[%s665 + $0x4] sm:$0xf]
        %s668 = smul.addr %s662, 4
        %s669 = scalar_lea.vmem %s553, %s668
        %v670 = vld [vmem:[%s669] sm:$0xf]
        %v671 = vld [vmem:[%s669 + $0x4] sm:$0xf]
        %v673 = vsel %vm652, %v645, 0
        %v676 = vsel %vm652, %v666, 0
        %678 = vmatpush.bf16.xpose.msra.mxu0 0
        %679 = vmatpush.bf16.xpose.msra.mxu0 0
        %680 = vmatpush.bf16.xpose.msra.mxu0 0
        %681 = vmatpush.bf16.xpose.msra.mxu0 0
        %682 = vmatpush.bf16.xpose.msra.mxu0 0
        %683 = vmatpush.bf16.xpose.msra.mxu0 0
        %684 = vmatpush.bf16.xpose.msra.mxu0 0
        %685 = vmatpush.bf16.xpose.msra.mxu0 %v676
        %686 = vmatmul.bf16.gmra.mxu0 %v673
        %v687 = vpop.f32.mrf.mxu0
        %v688 = vadd.f32 0.0, %v687
        %v689 = vpop.f32.mrf.mxu0
        %690 = vdwg.mxu0
        %v692 = vsel %vm652, %v646, 0
        %v695 = vsel %vm652, %v667, 0
        %697 = vmatpush.bf16.xpose.msra.mxu0 0
        %698 = vmatpush.bf16.xpose.msra.mxu0 0
        %699 = vmatpush.bf16.xpose.msra.mxu0 0
        %700 = vmatpush.bf16.xpose.msra.mxu0 0
        %701 = vmatpush.bf16.xpose.msra.mxu0 0
        %702 = vmatpush.bf16.xpose.msra.mxu0 0
        %703 = vmatpush.bf16.xpose.msra.mxu0 0
        %704 = vmatpush.bf16.xpose.msra.mxu0 %v695
        %705 = vmatmul.bf16.gmra.mxu0 %v692
        %v706 = vpop.f32.mrf.mxu0
        %v707 = vadd.f32 0.0, %v706
        %v708 = vpop.f32.mrf.mxu0
        %709 = vdwg.mxu0
        %v710 = vld [vmem:[#allocation2] sm:$0xff]
        %v711 = vld [vmem:[#allocation2 + $0x8] sm:$0xff]
        %vm712 = vcmask 64512
        %v713 = vsel %vm712, %v688, -inf
        %714 = vmax.xlane.f32.xlu0 %v713
        %v715 = vpop.xlane.xlu0 %714
        %v716 = vsel %vm712, %v707, -inf
        %717 = vmax.xlane.f32.xlu0 %v716
        %v718 = vpop.xlane.xlu0 %717
        %v719 = vmax.f32 %v710, %v715
        %v720 = vmax.f32 %v711, %v718
        %v721 = vsub.f32 %v710, %v719
        %v722 = vsub.f32 %v711, %v720
        %v723 = vmul.f32 %v721, 1.442695
        %v724 = vpow.pop %v723
        %v725 = vmul.f32 %v722, 1.442695
        %v726 = vpow.pop %v725
        %728 = vset.pattern.permute.xlu0 0
        %729 = vperm.xlu0 %728, %v719
        %v730 = vpop.permute.xlu0 %729
        %733 = vset.pattern.permute.xlu0 0
        %734 = vperm.xlu0 %733, %v720
        %v735 = vpop.permute.xlu0 %734
        %v737 = vsub.f32 %v688, %v730
        %v738 = vsub.f32 %v707, %v735
        %v739 = vmul.f32 %v737, 1.442695
        %v740 = vpow.pop %v739
        %v741 = vmul.f32 %v738, 1.442695
        %v742 = vpow.pop %v741
        %v743 = vld [vmem:[#allocation3] sm:$0xff]
        %v744 = vld [vmem:[#allocation3 + $0x8] sm:$0xff]
        %v745 = vmul.f32 %v724, %v743
        %v746 = vmul.f32 %v726, %v744
        %v747 = vsel %vm712, %v740, 0.0
        %748 = vadd.xlane.f32.xlu0 %v747
        %v749 = vpop.xlane.xlu0 %748
        %v750 = vsel %vm712, %v742, 0.0
        %751 = vadd.xlane.f32.xlu0 %v750
        %v752 = vpop.xlane.xlu0 %751
        %v753 = vadd.f32 %v745, %v749
        %v754 = vadd.f32 %v746, %v752
        %755 = vst.msk [vmem:[#allocation3] sm:$0xff] %vm647, %v753
        %756 = vst.msk [vmem:[#allocation3 + $0x8] sm:$0xff] %vm647, %v754
        %v757 = vld [vmem:[#allocation4] sm:$0xff]
        %v758 = vld [vmem:[#allocation4 + $0x8] sm:$0xff]
        %760 = vset.pattern.permute.xlu0 0
        %761 = vperm.xlu0 %760, %v724
        %v762 = vpop.permute.xlu0 %761
        %765 = vset.pattern.permute.xlu0 0
        %766 = vperm.xlu0 %765, %v726
        %v767 = vpop.permute.xlu0 %766
        %v769 = vmul.f32 %v762, %v757
        %v770 = vmul.f32 %v767, %v758
        %v771 = vpack.c.bf16 %v740, %v740
        %v772 = vpack.c.bf16 %v742, %v742
        %v774 = vsel %vm712, %v771, 0
        %vm776 = vcmask 1043456
        %v778 = vsel %vm776, %v670, 0
        %780 = vmatpush.bf16.msra.mxu0 0
        %781 = vmatpush.bf16.msra.mxu0 0
        %782 = vmatpush.bf16.msra.mxu0 0
        %783 = vmatpush.bf16.msra.mxu0 0
        %784 = vmatpush.bf16.msra.mxu0 0
        %785 = vmatpush.bf16.msra.mxu0 0
        %786 = vmatpush.bf16.msra.mxu0 0
        %787 = vmatpush.bf16.msra.mxu0 %v778
        %788 = vmatmul.bf16.gmra.mxu0 %v774
        %v789 = vpop.f32.mrf.mxu0
        %v790 = vadd.f32 0.0, %v789
        %v791 = vpop.f32.mrf.mxu0
        %792 = vdwg.mxu0
        %v794 = vsel %vm712, %v772, 0
        %v797 = vsel %vm776, %v671, 0
        %799 = vmatpush.bf16.msra.mxu0 0
        %800 = vmatpush.bf16.msra.mxu0 0
        %801 = vmatpush.bf16.msra.mxu0 0
        %802 = vmatpush.bf16.msra.mxu0 0
        %803 = vmatpush.bf16.msra.mxu0 0
        %804 = vmatpush.bf16.msra.mxu0 0
        %805 = vmatpush.bf16.msra.mxu0 0
        %806 = vmatpush.bf16.msra.mxu0 %v797
        %807 = vmatmul.bf16.gmra.mxu0 %v794
        %v808 = vpop.f32.mrf.mxu0
        %v809 = vadd.f32 0.0, %v808
        %v810 = vpop.f32.mrf.mxu0
        %811 = vdwg.mxu0
        %v812 = vadd.f32 %v769, %v790
        %v813 = vadd.f32 %v770, %v809
        %814 = vst.msk [vmem:[#allocation4] sm:$0xff] %vm652, %v812
        %815 = vst.msk [vmem:[#allocation4 + $0x8] sm:$0xff] %vm652, %v813
        %816 = vst.msk [vmem:[#allocation2] sm:$0xff] %vm647, %v719
        %817 = vst.msk [vmem:[#allocation2 + $0x8] sm:$0xff] %vm647, %v720
      $region85: #{gpt_forward.6} parent=79 // loop_footer
        %s658 = sadd.s32 %s656, 1
      $region86: #{gpt_forward.6} parent=79 // loop_footer_branch
        %655 = sbr.rel target = $region82
      $region87: #{gpt_forward.6} parent=79 // loop_exit
        _
      %s818 = smul.u32 %s31, 8
      %v819 = vlaneseq
      %v820 = vshrl.u32 %v819, 7
      %v821 = vlaneseq
      %v822 = vand.u32 %v821, 127
      %s823 = sshra.s32 %s818, 3
      %s824 = sand.u32 %s818, 7
      %s825 = smul.addr %s823, 4
      %s826 = scalar_lea.vmem %s548, %s825
      %v827 = vld [vmem:[%s826] sm:$0xf]
      %v828 = vld [vmem:[%s826 + $0x4] sm:$0xf]
      %s829 = smul.addr %s823, 4
      %s830 = scalar_lea.vmem %s553, %s829
      %v831 = vld [vmem:[%s830] sm:$0xf]
      %v832 = vld [vmem:[%s830 + $0x4] sm:$0xf]
      %vm833 = vcmp.ge.s32.totalorder %v820, %v822
      %v835 = vsel %vm652, %v645, 0
      %v838 = vsel %vm652, %v827, 0
      %840 = vmatpush.bf16.xpose.msra.mxu0 0
      %841 = vmatpush.bf16.xpose.msra.mxu0 0
      %842 = vmatpush.bf16.xpose.msra.mxu0 0
      %843 = vmatpush.bf16.xpose.msra.mxu0 0
      %844 = vmatpush.bf16.xpose.msra.mxu0 0
      %845 = vmatpush.bf16.xpose.msra.mxu0 0
      %846 = vmatpush.bf16.xpose.msra.mxu0 0
      %847 = vmatpush.bf16.xpose.msra.mxu0 %v838
      %848 = vmatmul.bf16.gmra.mxu0 %v835
      %v849 = vpop.f32.mrf.mxu0
      %v850 = vadd.f32 0.0, %v849
      %v851 = vpop.f32.mrf.mxu0
      %852 = vdwg.mxu0
      %v854 = vsel %vm652, %v646, 0
      %v857 = vsel %vm652, %v828, 0
      %859 = vmatpush.bf16.xpose.msra.mxu0 0
      %860 = vmatpush.bf16.xpose.msra.mxu0 0
      %861 = vmatpush.bf16.xpose.msra.mxu0 0
      %862 = vmatpush.bf16.xpose.msra.mxu0 0
      %863 = vmatpush.bf16.xpose.msra.mxu0 0
      %864 = vmatpush.bf16.xpose.msra.mxu0 0
      %865 = vmatpush.bf16.xpose.msra.mxu0 0
      %866 = vmatpush.bf16.xpose.msra.mxu0 %v857
      %867 = vmatmul.bf16.gmra.mxu0 %v854
      %v868 = vpop.f32.mrf.mxu0
      %v869 = vadd.f32 0.0, %v868
      %v870 = vpop.f32.mrf.mxu0
      %871 = vdwg.mxu0
      %v872 = vsel %vm833, 1, 0
      %vm873 = vcmp.eq.s32.totalorder %v872, 1
      %v874 = vsel %vm873, %v850, -1e+30
      %v875 = vsel %vm873, %v869, -1e+30
      %v876 = vld [vmem:[#allocation2] sm:$0xff]
      %v877 = vld [vmem:[#allocation2 + $0x8] sm:$0xff]
      %vm878 = vcmask 64512
      %v879 = vsel %vm878, %v874, -inf
      %880 = vmax.xlane.f32.xlu0 %v879
      %v881 = vpop.xlane.xlu0 %880
      %v882 = vsel %vm878, %v875, -inf
      %883 = vmax.xlane.f32.xlu0 %v882
      %v884 = vpop.xlane.xlu0 %883
      %v885 = vmax.f32 %v876, %v881
      %v886 = vmax.f32 %v877, %v884
      %v887 = vsub.f32 %v876, %v885
      %v888 = vsub.f32 %v877, %v886
      %v889 = vmul.f32 %v887, 1.442695
      %v890 = vpow.pop %v889
      %v891 = vmul.f32 %v888, 1.442695
      %v892 = vpow.pop %v891
      %894 = vset.pattern.permute.xlu0 0
      %895 = vperm.xlu0 %894, %v885
      %v896 = vpop.permute.xlu0 %895
      %899 = vset.pattern.permute.xlu0 0
      %900 = vperm.xlu0 %899, %v886
      %v901 = vpop.permute.xlu0 %900
      %v903 = vsub.f32 %v874, %v896
      %v904 = vsub.f32 %v875, %v901
      %v905 = vmul.f32 %v903, 1.442695
      %v906 = vpow.pop %v905
      %v907 = vmul.f32 %v904, 1.442695
      %v908 = vpow.pop %v907
      %v909 = vld [vmem:[#allocation3] sm:$0xff]
      %v910 = vld [vmem:[#allocation3 + $0x8] sm:$0xff]
      %v911 = vmul.f32 %v890, %v909
      %v912 = vmul.f32 %v892, %v910
      %v913 = vsel %vm878, %v906, 0.0
      %914 = vadd.xlane.f32.xlu0 %v913
      %v915 = vpop.xlane.xlu0 %914
      %v916 = vsel %vm878, %v908, 0.0
      %917 = vadd.xlane.f32.xlu0 %v916
      %v918 = vpop.xlane.xlu0 %917
      %v919 = vadd.f32 %v911, %v915
      %v920 = vadd.f32 %v912, %v918
      %921 = vst.msk [vmem:[#allocation3] sm:$0xff] %vm647, %v919
      %922 = vst.msk [vmem:[#allocation3 + $0x8] sm:$0xff] %vm647, %v920
      %v923 = vld [vmem:[#allocation4] sm:$0xff]
      %v924 = vld [vmem:[#allocation4 + $0x8] sm:$0xff]
      %926 = vset.pattern.permute.xlu0 0
      %927 = vperm.xlu0 %926, %v890
      %v928 = vpop.permute.xlu0 %927
      %931 = vset.pattern.permute.xlu0 0
      %932 = vperm.xlu0 %931, %v892
      %v933 = vpop.permute.xlu0 %932
      %v935 = vmul.f32 %v928, %v923
      %v936 = vmul.f32 %v933, %v924
      %v937 = vpack.c.bf16 %v906, %v906
      %v938 = vpack.c.bf16 %v908, %v908
      %v940 = vsel %vm878, %v937, 0
      %vm942 = vcmask 1043456
      %v944 = vsel %vm942, %v831, 0
      %946 = vmatpush.bf16.msra.mxu0 0
      %947 = vmatpush.bf16.msra.mxu0 0
      %948 = vmatpush.bf16.msra.mxu0 0
      %949 = vmatpush.bf16.msra.mxu0 0
      %950 = vmatpush.bf16.msra.mxu0 0
      %951 = vmatpush.bf16.msra.mxu0 0
      %952 = vmatpush.bf16.msra.mxu0 0
      %953 = vmatpush.bf16.msra.mxu0 %v944
      %954 = vmatmul.bf16.gmra.mxu0 %v940
      %v955 = vpop.f32.mrf.mxu0
      %v956 = vadd.f32 0.0, %v955
      %v957 = vpop.f32.mrf.mxu0
      %958 = vdwg.mxu0
      %v960 = vsel %vm878, %v938, 0
      %v963 = vsel %vm942, %v832, 0
      %965 = vmatpush.bf16.msra.mxu0 0
      %966 = vmatpush.bf16.msra.mxu0 0
      %967 = vmatpush.bf16.msra.mxu0 0
      %968 = vmatpush.bf16.msra.mxu0 0
      %969 = vmatpush.bf16.msra.mxu0 0
      %970 = vmatpush.bf16.msra.mxu0 0
      %971 = vmatpush.bf16.msra.mxu0 0
      %972 = vmatpush.bf16.msra.mxu0 %v963
      %973 = vmatmul.bf16.gmra.mxu0 %v960
      %v974 = vpop.f32.mrf.mxu0
      %v975 = vadd.f32 0.0, %v974
      %v976 = vpop.f32.mrf.mxu0
      %977 = vdwg.mxu0
      %v978 = vadd.f32 %v935, %v956
      %v979 = vadd.f32 %v936, %v975
      %980 = vst.msk [vmem:[#allocation4] sm:$0xff] %vm652, %v978
      %981 = vst.msk [vmem:[#allocation4 + $0x8] sm:$0xff] %vm652, %v979
      %982 = vst.msk [vmem:[#allocation2] sm:$0xff] %vm647, %v885
      %983 = vst.msk [vmem:[#allocation2 + $0x8] sm:$0xff] %vm647, %v886
      %v984 = vld [vmem:[#allocation4] sm:$0xff]
      %v985 = vld [vmem:[#allocation4 + $0x8] sm:$0xff]
      %v986 = vld [vmem:[#allocation3] sm:$0xff]
      %v987 = vld [vmem:[#allocation3 + $0x8] sm:$0xff]
      %v988 = vrcp.pop %v986
      %v989 = vrcp.pop %v987
      %991 = vset.pattern.permute.xlu0 0
      %992 = vperm.xlu0 %991, %v988
      %v993 = vpop.permute.xlu0 %992
      %996 = vset.pattern.permute.xlu0 0
      %997 = vperm.xlu0 %996, %v989
      %v998 = vpop.permute.xlu0 %997
      %v1000 = vmul.f32 %v984, %v993
      %v1001 = vmul.f32 %v985, %v998
      %1003 = vrot.lane.b32.xlu0 %v1001, 16
      %v1004 = vpop.permute.xlu0 %1003
      %v1006 = vsel %vm652, %v1000, %v1004
      %v1007 = vpack.c.bf16 %v1006, %v1006
      %v1008 = vld [vmem:[%s7] sm:$0xf]
      %v1009 = vld [vmem:[%s7 + $0x4] sm:$0xf]
      %v1010 = vld [vmem:[%s7 + $0x8] sm:$0xf]
      %v1011 = vld [vmem:[%s7 + $0xc] sm:$0xf]
      %v1012 = vld [vmem:[%s8] sm:$0x1]
      %v1014 = vperm.slane %v1012, 0
      %v1020 = vunpack.c.l.b16 %v1008
      %v1021 = vunpack.c.l.b16 %v1009
      %v1022 = vunpack.c.l.b16 %v1010
      %v1023 = vunpack.c.l.b16 %v1011
      %v1024 = vpack.c.b16 %v1021, %v1020
      %v1025 = vpack.c.b16 %v1023, %v1022
      %v1029 = vsel %vm565, %v1007, 0
      %1031 = vmatpush.bf16.msra.mxu0 0
      %1032 = vmatpush.bf16.msra.mxu0 0
      %1033 = vmatpush.bf16.msra.mxu0 0
      %1034 = vmatpush.bf16.msra.mxu0 0
      %1035 = vmatpush.bf16.msra.mxu0 0
      %1036 = vmatpush.bf16.msra.mxu0 0
      %1037 = vmatpush.bf16.msra.mxu0 %v1025
      %1038 = vmatpush.bf16.msra.mxu0 %v1024
      %1039 = vmatmul.bf16.gmra.mxu0 %v1029
      %v1040 = vpop.f32.mrf.mxu0
      %v1041 = vadd.f32 %v1014, %v1040
      %v1042 = vpop.f32.mrf.mxu0
      %1043 = vdwg.mxu0
      %v1044 = vadd.f32 %v562, %v1041
      %v1045 = vld [vmem:[%s9] sm:$0x1]
      %v1046 = vld [vmem:[%s10] sm:$0x1]
      %v1047 = vsel %vm565, %v1044, 0.0
      %1048 = vadd.xlane.f32.xlu0 %v1047
      %v1049 = vpop.xlane.xlu0 %1048
      %v1050 = vmul.f32 %v1049, %v575
      %v1051 = vsub.f32 %v1044, %v1050
      %v1052 = vmul.f32 %v1051, %v1051
      %v1053 = vsel %vm565, %v1052, 0.0
      %1054 = vadd.xlane.f32.xlu0 %v1053
      %v1055 = vpop.xlane.xlu0 %1054
      %v1056 = vmul.f32 %v1055, %v575
      %v1057 = vadd.f32 %v1056, 1e-05
      %v1058 = vrsqrt.pop %v1057
      %v1059 = vmul.f32 %v1058, %v1057
      %v1060 = vmul.f32 %v1059, %v1058
      %v1061 = vmul.f32 0.5, %v1060
      %v1062 = vsub.f32 1.5, %v1061
      %v1063 = vmul.f32 %v1058, %v1062
      %vm1064 = vweird.f32 %v1057
      %vm1065 = vweird.f32 %v1058
      %vm1066 = vmor %vm1064, %vm1065
      %v1067 = vsel %vm1066, %v1058, %v1063
      %v1068 = vmul.f32 %v1051, %v1067
      %v1070 = vperm.slane %v1045, 0
      %v1072 = vmul.f32 %v1068, %v1070
      %v1074 = vperm.slane %v1046, 0
      %v1076 = vadd.f32 %v1072, %v1074
      %v1077 = vpack.c.bf16 %v1076, %v1076
      %v1078 = vld [vmem:[%s11] sm:$0xf]
      %v1079 = vld [vmem:[%s11 + $0x4] sm:$0xf]
      %v1080 = vld [vmem:[%s11 + $0x8] sm:$0xf]
      %v1081 = vld [vmem:[%s11 + $0xc] sm:$0xf]
      %v1082 = vld [vmem:[%s12] sm:$0x1]
      %v1084 = vperm.slane %v1082, 0
      %v1090 = vunpack.c.l.b16 %v1078
      %v1091 = vunpack.c.l.b16 %v1079
      %v1092 = vunpack.c.l.b16 %v1080
      %v1093 = vunpack.c.l.b16 %v1081
      %v1094 = vpack.c.b16 %v1091, %v1090
      %v1095 = vpack.c.b16 %v1093, %v1092
      %v1099 = vsel %vm565, %v1077, 0
      %1101 = vmatpush.bf16.msra.mxu0 0
      %1102 = vmatpush.bf16.msra.mxu0 0
      %1103 = vmatpush.bf16.msra.mxu0 0
      %1104 = vmatpush.bf16.msra.mxu0 0
      %1105 = vmatpush.bf16.msra.mxu0 0
      %1106 = vmatpush.bf16.msra.mxu0 0
      %1107 = vmatpush.bf16.msra.mxu0 %v1095
      %1108 = vmatpush.bf16.msra.mxu0 %v1094
      %1109 = vmatmul.bf16.gmra.mxu0 %v1099
      %v1110 = vpop.f32.mrf.mxu0
      %v1111 = vadd.f32 %v1084, %v1110
      %v1112 = vpop.f32.mrf.mxu0
      %1113 = vdwg.mxu0
      %v1114 = vmul.f32 %v1111, 0.5
      %v1115 = vmul.f32 %v1111, 0.044715
      %v1116 = vmul.f32 %v1115, %v1111
      %v1117 = vmul.f32 %v1116, %v1111
      %v1118 = vadd.f32 %v1111, %v1117
      %v1119 = vmul.f32 %v1118, 0.7978846
      %v1120 = vtanh.pop %v1119
      %v1121 = vadd.f32 %v1120, 1.0
      %v1122 = vmul.f32 %v1114, %v1121
      %v1123 = vpack.c.bf16 %v1122, %v1122
      %v1124 = vld [vmem:[%s13] sm:$0xf]
      %v1125 = vld [vmem:[%s13 + $0x4] sm:$0xf]
      %v1126 = vld [vmem:[%s13 + $0x8] sm:$0xf]
      %v1127 = vld [vmem:[%s13 + $0xc] sm:$0xf]
      %v1128 = vld [vmem:[%s13 + $0x10] sm:$0xf]
      %v1129 = vld [vmem:[%s13 + $0x14] sm:$0xf]
      %v1130 = vld [vmem:[%s13 + $0x18] sm:$0xf]
      %v1131 = vld [vmem:[%s13 + $0x1c] sm:$0xf]
      %v1132 = vld [vmem:[%s13 + $0x20] sm:$0xf]
      %v1133 = vld [vmem:[%s13 + $0x24] sm:$0xf]
      %v1134 = vld [vmem:[%s13 + $0x28] sm:$0xf]
      %v1135 = vld [vmem:[%s13 + $0x2c] sm:$0xf]
      %v1136 = vld [vmem:[%s13 + $0x30] sm:$0xf]
      %v1137 = vld [vmem:[%s13 + $0x34] sm:$0xf]
      %v1138 = vld [vmem:[%s13 + $0x38] sm:$0xf]
      %v1139 = vld [vmem:[%s13 + $0x3c] sm:$0xf]
      %v1140 = vld [vmem:[%s14] sm:$0x1]
      %v1142 = vperm.slane %v1140, 0
      %v1160 = vunpack.c.l.b16 %v1124
      %v1161 = vunpack.c.l.b16 %v1125
      %v1162 = vunpack.c.l.b16 %v1126
      %v1163 = vunpack.c.l.b16 %v1127
      %v1164 = vunpack.c.l.b16 %v1128
      %v1165 = vunpack.c.l.b16 %v1129
      %v1166 = vunpack.c.l.b16 %v1130
      %v1167 = vunpack.c.l.b16 %v1131
      %v1168 = vunpack.c.l.b16 %v1132
      %v1169 = vunpack.c.l.b16 %v1133
      %v1170 = vunpack.c.l.b16 %v1134
      %v1171 = vunpack.c.l.b16 %v1135
      %v1172 = vunpack.c.l.b16 %v1136
      %v1173 = vunpack.c.l.b16 %v1137
      %v1174 = vunpack.c.l.b16 %v1138
      %v1175 = vunpack.c.l.b16 %v1139
      %v1176 = vpack.c.b16 %v1161, %v1160
      %v1177 = vpack.c.b16 %v1163, %v1162
      %v1178 = vpack.c.b16 %v1165, %v1164
      %v1179 = vpack.c.b16 %v1167, %v1166
      %v1180 = vpack.c.b16 %v1169, %v1168
      %v1181 = vpack.c.b16 %v1171, %v1170
      %v1182 = vpack.c.b16 %v1173, %v1172
      %v1183 = vpack.c.b16 %v1175, %v1174
      %1192 = vmatpush.bf16.msra.mxu0 %v1183
      %1193 = vmatpush.bf16.msra.mxu0 %v1182
      %1194 = vmatpush.bf16.msra.mxu0 %v1181
      %1195 = vmatpush.bf16.msra.mxu0 %v1180
      %1196 = vmatpush.bf16.msra.mxu0 %v1179
      %1197 = vmatpush.bf16.msra.mxu0 %v1178
      %1198 = vmatpush.bf16.msra.mxu0 %v1177
      %1199 = vmatpush.bf16.msra.mxu0 %v1176
      %1200 = vmatmul.bf16.gmra.mxu0 %v1123
      %v1201 = vpop.f32.mrf.mxu0
      %v1202 = vadd.f32 %v1142, %v1201
      %v1203 = vpop.f32.mrf.mxu0
      %1204 = vdwg.mxu0
      %v1205 = vadd.f32 %v1044, %v1202
      %1206 = vst.msk [vmem:[%s560] sm:$0xff] %vm565, %v1205
      %p1207 = scmp.lt.s32.totalorder %s30, 1
      %s1208 = scalar_select %p1207, %s30, 1
      %p1209 = scmp.lt.s32.totalorder %s31, 0
      %s1210 = scalar_select %p1209, %s31, 0
      %s1211 = sadd.s32 %s1210, %s1208
      %s1212 = smul.addr %s1211, 8
      %s1213 = scalar_lea.vmem %s15, %s1212
      // Predicated region
      $region88: #{gpt_forward.6} parent=79 // pred_check
        %p1214 = pneg %p390
      $region89: #{gpt_forward.6} parent=79 // pred_check_branch
        %1216 = sbr.rel (%p1214) target = $region91
      $region90: #{gpt_forward.6} parent=79 // pred_region
        _
      $region91: #{gpt_forward.6} parent=79 // pred_fallthru
        _
    $region80: #{gpt_forward.6} parent=5 // pred_fallthru
      _
    %p1217 = scmp.le.s32.totalorder 2, %s21
    // Predicated region
    $region92: #{gpt_forward.6} parent=5 // pred_check
      %p1218 = pneg %p1217
    $region93: #{gpt_forward.6} parent=5 // pred_check_branch
      %1220 = sbr.rel (%p1218) target = $region95
    $region94: #{gpt_forward.6} parent=5 // pred_region
      %s1221 = ssub.s32 %s21, 2
      // Predicated region
      $region96: #{gpt_forward.6} parent=94 // pred_check
        %p1222 = pneg %p396
      $region97: #{gpt_forward.6} parent=94 // pred_check_branch
        %1224 = sbr.rel (%p1222) target = $region99
      $region98: #{gpt_forward.6} parent=94 // pred_region
        %p1225 = scmp.lt.s32.totalorder %s32, 1
        %s1226 = scalar_select %p1225, %s32, 1
        %p1227 = scmp.lt.s32.totalorder %s33, 0
        %s1228 = scalar_select %p1227, %s33, 0
        %s1229 = sadd.s32 %s1228, %s1226
        %s1230 = smul.addr %s1229, 8
        %s1231 = scalar_lea.vmem %s15, %s1230
      $region99: #{gpt_forward.6} parent=94 // pred_fallthru
        _
    $region95: #{gpt_forward.6} parent=5 // pred_fallthru
      _
  $region6: #{gpt_forward.6} parent=0 // loop_footer
    %s25 = sadd.s32 1, %s21
  $region7: #{gpt_forward.6} parent=0 // loop_footer_branch
    %20 = sbr.rel target = $region3
  $region8: #{gpt_forward.6} parent=0 // loop_exit
    _

</llo_original>
